<compile_context>
chip_gen: v7x
topology: tpu7x:2x2x1
jax: 0.10.0
libtpu: 0.0.40
codegen_flags: <defaults>
</compile_context>

<pallas_src>
import jax
import jax.numpy as jnp
from jax.experimental import pallas as pl
from jax.experimental.pallas import tpu as pltpu


def _make_kernel(T):
    """Build the kernel with a static iteration count T (unrolled Python loop)."""

    def kernel(params_ref, u_ref, m_ref, a_out_ref):
        # params (all torch.randn(1) scalars):
        # [w, s, k_outer, alpha, beta, y_a, y_b, p, k_cell]
        w      = params_ref[0]
        s      = params_ref[1]
        k_out  = params_ref[2]
        alpha  = params_ref[3]
        beta   = params_ref[4]
        y_a    = params_ref[5]
        y_b    = params_ref[6]
        p      = params_ref[7]
        k_cell = params_ref[8]

        U0 = u_ref[...]          # (B, N, N) f32
        M  = m_ref[...]          # (B, N, N) f32

        sig = jax.nn.sigmoid
        relu = lambda x: jnp.maximum(x, 0.0)

        halfM = 0.5 * M          # hoisted: tau(a) = (a*a + (a*a)^T) * (0.5*M)

        def tau(a):
            aa = a * a
            return (aa + jnp.transpose(aa, (0, 2, 1))) * halfM

        # ---- PostProcessingNetwork.forward prologue ----
        U = sig((U0 - s) * k_out) * U0
        A_hat = sig((U - s) * k_out) * sig(U)
        A = tau(A_hat)
        # ones = torch.ones(U.size()[1:2]) -> shape (N,), i.e. subtract 1.0
        r = jnp.sum(A, axis=1) - 1.0                         # (B, N), CSE'd across the loop
        lambd = w * relu(r)                                  # (B, N)

        # ---- loop-invariant hoists ----
        Usym = 0.5 * (U + jnp.transpose(U, (0, 2, 1)))       # (B, N, N)
        aya  = alpha * y_a
        thr  = p * aya
        byb  = beta * y_b
        ayaM = aya * M                                       # (B, N, N)

        # ---- T iterations of PPcell (T is static -> unrolled) ----
        for _ in range(T):
            v = lambd * sig(r * k_cell)                      # (B, N)
            # gmat = v @ ones((N,B)) has gmat[i, j] = sum_k v[i, k]  (row-sum, no MXU).
            s_i = jnp.sum(v, axis=1, keepdims=True)[None, :, :]   # (1, B, 1) -> S[i]
            s_j = jnp.transpose(s_i, (0, 2, 1))                   # (1, 1, B) -> S[j]
            # g + g^T = 0.5*(U + U^T) - (S[i] + S[j]); gmat broadcasts as (1,B,B) vs (B,N,N).
            gsym = Usym - s_i - s_j                               # (B, N, N)
            A_dot = A_hat + A_hat * ayaM * gsym
            A_hat = relu(jnp.abs(A_dot) - thr)
            A_hat = jnp.minimum(A_hat, 1.0)                  # == 1 - relu(1 - A_hat)
            A = tau(A_hat)
            r = jnp.sum(A, axis=1) - 1.0                     # reused by lambd and next v
            lambd = lambd + byb * relu(r)
            # TODO(synk): torch debug side-effect `print(A.sum())` omitted.

        a_out_ref[...] = A

    return kernel


def post_processing_network(U, M, params, n_iterations):
    B, N, N2 = U.shape
    assert N == N2 and B == N, "PyTorch broadcast in PPcell requires B == N"
    kernel = _make_kernel(n_iterations)
    return pl.pallas_call(
        kernel,
        out_shape=jax.ShapeDtypeStruct((B, N, N), jnp.float32),
        in_specs=[
            pl.BlockSpec(memory_space=pltpu.MemorySpace.SMEM),   # 9 scalar params
            pl.BlockSpec(memory_space=pltpu.MemorySpace.VMEM),   # U (full block)
            pl.BlockSpec(memory_space=pltpu.MemorySpace.VMEM),   # M (full block)
        ],
        out_specs=pl.BlockSpec(memory_space=pltpu.MemorySpace.VMEM),
    )(params, U, M)


if __name__ == "__main__":
    key = jax.random.PRNGKey(0)
    kU, kM, kP = jax.random.split(key, 3)

    B = N = 8          # N must equal B for the module's broadcasts to be valid
    T = 3              # n_iterations

    U = jax.random.normal(kU, (B, N, N), dtype=jnp.float32)
    M = (jax.random.uniform(kM, (B, N, N)) > 0.5).astype(jnp.float32)

    # Deterministic parameter init (each was torch.randn(1)):
    # [w, s, k_outer, alpha, beta, y_a, y_b, p, k_cell]
    params = jax.random.normal(kP, (9,), dtype=jnp.float32)

    A = post_processing_network(U, M, params, T)
    jax.block_until_ready(A)
    print("KERNEL_OK")
</pallas_src>

<mosaic_0001>
module attributes {stable_mosaic.version = 11 : i64} {
  func.func @kernel(%arg0: memref<9xf32, #tpu.memory_space<smem>>, %arg1: memref<8x8x8xf32, #tpu.memory_space<vmem>>, %arg2: memref<8x8x8xf32, #tpu.memory_space<vmem>>, %arg3: memref<8x8x8xf32, #tpu.memory_space<vmem>>) attributes {dimension_semantics = [], scalar_prefetch = 0 : i64, scratch_operands = 0 : i64, tpu.core_type = #tpu.core_type<tc>} {
    %c0 = arith.constant 0 : index
    %0 = memref.load %arg0[%c0] : memref<9xf32, #tpu.memory_space<smem>>
    %c1 = arith.constant 1 : index
    %1 = memref.load %arg0[%c1] : memref<9xf32, #tpu.memory_space<smem>>
    %c2 = arith.constant 2 : index
    %2 = memref.load %arg0[%c2] : memref<9xf32, #tpu.memory_space<smem>>
    %c3 = arith.constant 3 : index
    %3 = memref.load %arg0[%c3] : memref<9xf32, #tpu.memory_space<smem>>
    %c4 = arith.constant 4 : index
    %4 = memref.load %arg0[%c4] : memref<9xf32, #tpu.memory_space<smem>>
    %c5 = arith.constant 5 : index
    %5 = memref.load %arg0[%c5] : memref<9xf32, #tpu.memory_space<smem>>
    %c6 = arith.constant 6 : index
    %6 = memref.load %arg0[%c6] : memref<9xf32, #tpu.memory_space<smem>>
    %c7 = arith.constant 7 : index
    %7 = memref.load %arg0[%c7] : memref<9xf32, #tpu.memory_space<smem>>
    %c8 = arith.constant 8 : index
    %8 = memref.load %arg0[%c8] : memref<9xf32, #tpu.memory_space<smem>>
    %c0_0 = arith.constant 0 : index
    %c0_1 = arith.constant 0 : index
    %c0_2 = arith.constant 0 : index
    %9 = vector.load %arg1[%c0_0, %c0_1, %c0_2] : memref<8x8x8xf32, #tpu.memory_space<vmem>>, vector<8x8x8xf32>
    %c0_3 = arith.constant 0 : index
    %c0_4 = arith.constant 0 : index
    %c0_5 = arith.constant 0 : index
    %10 = vector.load %arg2[%c0_3, %c0_4, %c0_5] : memref<8x8x8xf32, #tpu.memory_space<vmem>>, vector<8x8x8xf32>
    %cst = arith.constant 5.000000e-01 : f32
    %11 = vector.broadcast %cst : f32 to vector<8x8x8xf32>
    %12 = arith.mulf %11, %10 : vector<8x8x8xf32>
    %13 = vector.broadcast %1 : f32 to vector<8x8x8xf32>
    %14 = arith.subf %9, %13 : vector<8x8x8xf32>
    %15 = vector.broadcast %2 : f32 to vector<8x8x8xf32>
    %16 = arith.mulf %14, %15 : vector<8x8x8xf32>
    %17 = arith.negf %16 : vector<8x8x8xf32>
    %18 = math.exp %17 : vector<8x8x8xf32>
    %cst_6 = arith.constant 1.000000e+00 : f32
    %19 = vector.broadcast %cst_6 : f32 to vector<8x8x8xf32>
    %20 = arith.addf %19, %18 : vector<8x8x8xf32>
    %21 = arith.divf %19, %20 : vector<8x8x8xf32>
    %22 = arith.mulf %21, %9 : vector<8x8x8xf32>
    %23 = vector.broadcast %1 : f32 to vector<8x8x8xf32>
    %24 = arith.subf %22, %23 : vector<8x8x8xf32>
    %25 = vector.broadcast %2 : f32 to vector<8x8x8xf32>
    %26 = arith.mulf %24, %25 : vector<8x8x8xf32>
    %27 = arith.negf %26 : vector<8x8x8xf32>
    %28 = math.exp %27 : vector<8x8x8xf32>
    %cst_7 = arith.constant 1.000000e+00 : f32
    %29 = vector.broadcast %cst_7 : f32 to vector<8x8x8xf32>
    %30 = arith.addf %29, %28 : vector<8x8x8xf32>
    %31 = arith.divf %29, %30 : vector<8x8x8xf32>
    %32 = arith.negf %22 : vector<8x8x8xf32>
    %33 = math.exp %32 : vector<8x8x8xf32>
    %cst_8 = arith.constant 1.000000e+00 : f32
    %34 = vector.broadcast %cst_8 : f32 to vector<8x8x8xf32>
    %35 = arith.addf %34, %33 : vector<8x8x8xf32>
    %36 = arith.divf %34, %35 : vector<8x8x8xf32>
    %37 = arith.mulf %31, %36 : vector<8x8x8xf32>
    %38 = arith.mulf %37, %37 : vector<8x8x8xf32>
    %39 = tpu.transpose %38, [0, 2, 1] : vector<8x8x8xf32> -> vector<8x8x8xf32>
    %40 = arith.addf %38, %39 : vector<8x8x8xf32>
    %41 = arith.mulf %40, %12 : vector<8x8x8xf32>
    %cst_9 = arith.constant dense<0.000000e+00> : vector<8x8xf32>
    %42 = vector.multi_reduction <add>, %41, %cst_9 [1] : vector<8x8x8xf32> to vector<8x8xf32>
    %cst_10 = arith.constant 1.000000e+00 : f32
    %43 = vector.broadcast %cst_10 : f32 to vector<8x8xf32>
    %44 = arith.subf %42, %43 : vector<8x8xf32>
    %cst_11 = arith.constant 0.000000e+00 : f32
    %45 = vector.broadcast %cst_11 : f32 to vector<8x8xf32>
    %46 = arith.maximumf %44, %45 : vector<8x8xf32>
    %47 = vector.broadcast %0 : f32 to vector<8x8xf32>
    %48 = arith.mulf %47, %46 : vector<8x8xf32>
    %49 = tpu.transpose %22, [0, 2, 1] : vector<8x8x8xf32> -> vector<8x8x8xf32>
    %50 = arith.addf %22, %49 : vector<8x8x8xf32>
    %cst_12 = arith.constant 5.000000e-01 : f32
    %51 = vector.broadcast %cst_12 : f32 to vector<8x8x8xf32>
    %52 = arith.mulf %51, %50 : vector<8x8x8xf32>
    %53 = arith.mulf %3, %5 : f32
    %54 = arith.mulf %7, %53 : f32
    %55 = arith.mulf %4, %6 : f32
    %56 = vector.broadcast %53 : f32 to vector<8x8x8xf32>
    %57 = arith.mulf %56, %10 : vector<8x8x8xf32>
    %58 = vector.broadcast %8 : f32 to vector<8x8xf32>
    %59 = arith.mulf %44, %58 : vector<8x8xf32>
    %60 = arith.negf %59 : vector<8x8xf32>
    %61 = math.exp %60 : vector<8x8xf32>
    %cst_13 = arith.constant 1.000000e+00 : f32
    %62 = vector.broadcast %cst_13 : f32 to vector<8x8xf32>
    %63 = arith.addf %62, %61 : vector<8x8xf32>
    %64 = arith.divf %62, %63 : vector<8x8xf32>
    %65 = arith.mulf %48, %64 : vector<8x8xf32>
    %cst_14 = arith.constant dense<0.000000e+00> : vector<8xf32>
    %66 = vector.multi_reduction <add>, %65, %cst_14 [1] : vector<8x8xf32> to vector<8xf32>
    %67 = vector.shape_cast %66 : vector<8xf32> to vector<8x1xf32>
    %68 = vector.shape_cast %67 : vector<8x1xf32> to vector<1x8x1xf32>
    %69 = tpu.transpose %68, [0, 2, 1] : vector<1x8x1xf32> -> vector<1x1x8xf32>
    %70 = vector.broadcast %68 : vector<1x8x1xf32> to vector<8x8x8xf32>
    %71 = arith.subf %52, %70 : vector<8x8x8xf32>
    %72 = vector.broadcast %69 : vector<1x1x8xf32> to vector<8x8x8xf32>
    %73 = arith.subf %71, %72 : vector<8x8x8xf32>
    %74 = arith.mulf %37, %57 : vector<8x8x8xf32>
    %75 = arith.mulf %74, %73 : vector<8x8x8xf32>
    %76 = arith.addf %37, %75 : vector<8x8x8xf32>
    %77 = math.absf %76 : vector<8x8x8xf32>
    %78 = vector.broadcast %54 : f32 to vector<8x8x8xf32>
    %79 = arith.subf %77, %78 : vector<8x8x8xf32>
    %cst_15 = arith.constant 0.000000e+00 : f32
    %80 = vector.broadcast %cst_15 : f32 to vector<8x8x8xf32>
    %81 = arith.maximumf %79, %80 : vector<8x8x8xf32>
    %cst_16 = arith.constant 1.000000e+00 : f32
    %82 = vector.broadcast %cst_16 : f32 to vector<8x8x8xf32>
    %83 = arith.minimumf %81, %82 : vector<8x8x8xf32>
    %84 = arith.mulf %83, %83 : vector<8x8x8xf32>
    %85 = tpu.transpose %84, [0, 2, 1] : vector<8x8x8xf32> -> vector<8x8x8xf32>
    %86 = arith.addf %84, %85 : vector<8x8x8xf32>
    %87 = arith.mulf %86, %12 : vector<8x8x8xf32>
    %cst_17 = arith.constant dense<0.000000e+00> : vector<8x8xf32>
    %88 = vector.multi_reduction <add>, %87, %cst_17 [1] : vector<8x8x8xf32> to vector<8x8xf32>
    %cst_18 = arith.constant 1.000000e+00 : f32
    %89 = vector.broadcast %cst_18 : f32 to vector<8x8xf32>
    %90 = arith.subf %88, %89 : vector<8x8xf32>
    %cst_19 = arith.constant 0.000000e+00 : f32
    %91 = vector.broadcast %cst_19 : f32 to vector<8x8xf32>
    %92 = arith.maximumf %90, %91 : vector<8x8xf32>
    %93 = vector.broadcast %55 : f32 to vector<8x8xf32>
    %94 = arith.mulf %93, %92 : vector<8x8xf32>
    %95 = arith.addf %48, %94 : vector<8x8xf32>
    %96 = vector.broadcast %8 : f32 to vector<8x8xf32>
    %97 = arith.mulf %90, %96 : vector<8x8xf32>
    %98 = arith.negf %97 : vector<8x8xf32>
    %99 = math.exp %98 : vector<8x8xf32>
    %cst_20 = arith.constant 1.000000e+00 : f32
    %100 = vector.broadcast %cst_20 : f32 to vector<8x8xf32>
    %101 = arith.addf %100, %99 : vector<8x8xf32>
    %102 = arith.divf %100, %101 : vector<8x8xf32>
    %103 = arith.mulf %95, %102 : vector<8x8xf32>
    %cst_21 = arith.constant dense<0.000000e+00> : vector<8xf32>
    %104 = vector.multi_reduction <add>, %103, %cst_21 [1] : vector<8x8xf32> to vector<8xf32>
    %105 = vector.shape_cast %104 : vector<8xf32> to vector<8x1xf32>
    %106 = vector.shape_cast %105 : vector<8x1xf32> to vector<1x8x1xf32>
    %107 = tpu.transpose %106, [0, 2, 1] : vector<1x8x1xf32> -> vector<1x1x8xf32>
    %108 = vector.broadcast %106 : vector<1x8x1xf32> to vector<8x8x8xf32>
    %109 = arith.subf %52, %108 : vector<8x8x8xf32>
    %110 = vector.broadcast %107 : vector<1x1x8xf32> to vector<8x8x8xf32>
    %111 = arith.subf %109, %110 : vector<8x8x8xf32>
    %112 = arith.mulf %83, %57 : vector<8x8x8xf32>
    %113 = arith.mulf %112, %111 : vector<8x8x8xf32>
    %114 = arith.addf %83, %113 : vector<8x8x8xf32>
    %115 = math.absf %114 : vector<8x8x8xf32>
    %116 = vector.broadcast %54 : f32 to vector<8x8x8xf32>
    %117 = arith.subf %115, %116 : vector<8x8x8xf32>
    %cst_22 = arith.constant 0.000000e+00 : f32
    %118 = vector.broadcast %cst_22 : f32 to vector<8x8x8xf32>
    %119 = arith.maximumf %117, %118 : vector<8x8x8xf32>
    %cst_23 = arith.constant 1.000000e+00 : f32
    %120 = vector.broadcast %cst_23 : f32 to vector<8x8x8xf32>
    %121 = arith.minimumf %119, %120 : vector<8x8x8xf32>
    %122 = arith.mulf %121, %121 : vector<8x8x8xf32>
    %123 = tpu.transpose %122, [0, 2, 1] : vector<8x8x8xf32> -> vector<8x8x8xf32>
    %124 = arith.addf %122, %123 : vector<8x8x8xf32>
    %125 = arith.mulf %124, %12 : vector<8x8x8xf32>
    %cst_24 = arith.constant dense<0.000000e+00> : vector<8x8xf32>
    %126 = vector.multi_reduction <add>, %125, %cst_24 [1] : vector<8x8x8xf32> to vector<8x8xf32>
    %cst_25 = arith.constant 1.000000e+00 : f32
    %127 = vector.broadcast %cst_25 : f32 to vector<8x8xf32>
    %128 = arith.subf %126, %127 : vector<8x8xf32>
    %cst_26 = arith.constant 0.000000e+00 : f32
    %129 = vector.broadcast %cst_26 : f32 to vector<8x8xf32>
    %130 = arith.maximumf %128, %129 : vector<8x8xf32>
    %131 = vector.broadcast %55 : f32 to vector<8x8xf32>
    %132 = arith.mulf %131, %130 : vector<8x8xf32>
    %133 = arith.addf %95, %132 : vector<8x8xf32>
    %134 = vector.broadcast %8 : f32 to vector<8x8xf32>
    %135 = arith.mulf %128, %134 : vector<8x8xf32>
    %136 = arith.negf %135 : vector<8x8xf32>
    %137 = math.exp %136 : vector<8x8xf32>
    %cst_27 = arith.constant 1.000000e+00 : f32
    %138 = vector.broadcast %cst_27 : f32 to vector<8x8xf32>
    %139 = arith.addf %138, %137 : vector<8x8xf32>
    %140 = arith.divf %138, %139 : vector<8x8xf32>
    %141 = arith.mulf %133, %140 : vector<8x8xf32>
    %cst_28 = arith.constant dense<0.000000e+00> : vector<8xf32>
    %142 = vector.multi_reduction <add>, %141, %cst_28 [1] : vector<8x8xf32> to vector<8xf32>
    %143 = vector.shape_cast %142 : vector<8xf32> to vector<8x1xf32>
    %144 = vector.shape_cast %143 : vector<8x1xf32> to vector<1x8x1xf32>
    %145 = tpu.transpose %144, [0, 2, 1] : vector<1x8x1xf32> -> vector<1x1x8xf32>
    %146 = vector.broadcast %144 : vector<1x8x1xf32> to vector<8x8x8xf32>
    %147 = arith.subf %52, %146 : vector<8x8x8xf32>
    %148 = vector.broadcast %145 : vector<1x1x8xf32> to vector<8x8x8xf32>
    %149 = arith.subf %147, %148 : vector<8x8x8xf32>
    %150 = arith.mulf %121, %57 : vector<8x8x8xf32>
    %151 = arith.mulf %150, %149 : vector<8x8x8xf32>
    %152 = arith.addf %121, %151 : vector<8x8x8xf32>
    %153 = math.absf %152 : vector<8x8x8xf32>
    %154 = vector.broadcast %54 : f32 to vector<8x8x8xf32>
    %155 = arith.subf %153, %154 : vector<8x8x8xf32>
    %cst_29 = arith.constant 0.000000e+00 : f32
    %156 = vector.broadcast %cst_29 : f32 to vector<8x8x8xf32>
    %157 = arith.maximumf %155, %156 : vector<8x8x8xf32>
    %cst_30 = arith.constant 1.000000e+00 : f32
    %158 = vector.broadcast %cst_30 : f32 to vector<8x8x8xf32>
    %159 = arith.minimumf %157, %158 : vector<8x8x8xf32>
    %160 = arith.mulf %159, %159 : vector<8x8x8xf32>
    %161 = tpu.transpose %160, [0, 2, 1] : vector<8x8x8xf32> -> vector<8x8x8xf32>
    %162 = arith.addf %160, %161 : vector<8x8x8xf32>
    %163 = arith.mulf %162, %12 : vector<8x8x8xf32>
    %c0_31 = arith.constant 0 : index
    %c0_32 = arith.constant 0 : index
    %c0_33 = arith.constant 0 : index
    %164 = vector.load %arg3[%c0_31, %c0_32, %c0_33] : memref<8x8x8xf32, #tpu.memory_space<vmem>>, vector<8x8x8xf32>
    tpu.vector_store %arg3[%c0_31, %c0_32, %c0_33], %163 {strides = array<i32>} : memref<8x8x8xf32, #tpu.memory_space<vmem>>, vector<8x8x8xf32>,
    return
  }
}

</mosaic_0001>

<llo_original>
// kernel: tpu_custom_call.1
$region0: #{tpu_custom_call.1}
  #allocation0 [shape = 'u32[]', space=smem, size = 0x4, offset = 0x4, fixed_abs, tag = 'smem constant byte address 0x4 - core index']
  #allocation1 [shape = 'u32[144,128]{1,0:T(1,128)}', space=vmem, size = 0x12000, scoped, tag = 'internal scratch']
  %s0 = inlined_call_operand.hbm [shape: f32[9], index: 0, kind: input, shape index: {}]
  %s1 = inlined_call_operand.hbm [shape: f32[8,8,8], index: 1, kind: input, shape index: {}]
  %s2 = inlined_call_operand.hbm [shape: f32[8,8,8], index: 2, kind: input, shape index: {}]
  %s3 = inlined_call_operand.hbm [shape: f32[8,8,8], index: 3, kind: output, shape index: {}]
  %s4 = sld [smem:[#allocation0]]
  $region34: #{tpu_custom_call.1} parent=0
    _
  %s6 = ssub.s32 1, %s4
  %s7 = scalar_select 0, %s6, %s4
  $region1: #{tpu_custom_call.1} parent=0
    #allocation2 [shape = 'u8[512]{0}', space=smem, size = 0x200, scoped, tag = 'input window, operand 0, single buffered']
    #allocation3 [shape = 's32[1]{0}', space=sflag, size = 0x4, scoped, tag = 'scoped memory for tpu_custom_call.1']
    #allocation4 [shape = 's32[1]{0}', space=sflag, size = 0x4, scoped, tag = 'scoped memory for tpu_custom_call.1']
    #allocation5 [shape = 's32[1]{0}', space=sflag, size = 0x4, scoped, tag = 'scoped memory for tpu_custom_call.1']
    #allocation6 [shape = 'u8[32768]{0}', space=vmem, size = 0x8000, scoped, tag = 'input window, operand 1, single buffered']
    #allocation7 [shape = 'u8[32768]{0}', space=vmem, size = 0x8000, scoped, tag = 'input window, operand 2, single buffered']
    #allocation8 [shape = 's32[1]{0}', space=sflag, size = 0x4, scoped, tag = 'scoped memory for tpu_custom_call.1']
    #allocation9 [shape = 'u8[32768]{0}', space=vmem, size = 0x8000, scoped, tag = 'output window, operand 0, single buffered']
    %8 = vsyncpa [#allocation5], 0
    %9 = vsyncpa [#allocation3], 0
    %10 = vsyncpa [#allocation8], 0
    %11 = vsyncpa [#allocation4], 0
    // Predicated region
    $region2: #{tpu_custom_call.1} parent=1 // pred_check
      _
    $region3: #{tpu_custom_call.1} parent=1 // pred_check_branch
      %13 = sbr.rel (0) target = $region5
    $region4: #{tpu_custom_call.1} parent=1 // pred_region
      %s15 = ssub.s32 16, 16
      %16 = vsyncadd [#allocation5], %s15
      %19 = dma.hbm_to_smem %s0, 16, [#allocation2], [#allocation5]
    $region5: #{tpu_custom_call.1} parent=1 // pred_fallthru
      _
    // Predicated region
    $region6: #{tpu_custom_call.1} parent=1 // pred_check
      _
    $region7: #{tpu_custom_call.1} parent=1 // pred_check_branch
      %21 = sbr.rel (0) target = $region9
    $region8: #{tpu_custom_call.1} parent=1 // pred_region
      %s23 = ssub.s32 1024, 1024
      %24 = vsyncadd [#allocation3], %s23
      %s25 = sshll.u32 [#allocation6], 4
      %s26 = int_to_ptr.vmem [resolvable:$true] %s25
      %31 = dma.hbm_to_vmem [thread:$0]  %s1, 1024, %s26, [#allocation3], 128, 128, 8
    $region9: #{tpu_custom_call.1} parent=1 // pred_fallthru
      _
    // Predicated region
    $region10: #{tpu_custom_call.1} parent=1 // pred_check
      _
    $region11: #{tpu_custom_call.1} parent=1 // pred_check_branch
      %33 = sbr.rel (0) target = $region13
    $region12: #{tpu_custom_call.1} parent=1 // pred_region
      %s35 = ssub.s32 1024, 1024
      %36 = vsyncadd [#allocation8], %s35
      %s37 = sshll.u32 [#allocation7], 4
      %s38 = int_to_ptr.vmem [resolvable:$true] %s37
      %43 = dma.hbm_to_vmem [thread:$0]  %s2, 1024, %s38, [#allocation8], 128, 128, 8
    $region13: #{tpu_custom_call.1} parent=1 // pred_fallthru
      _
    // Predicated region
    $region14: #{tpu_custom_call.1} parent=1 // pred_check
      _
    $region15: #{tpu_custom_call.1} parent=1 // pred_check_branch
      %45 = sbr.rel (0) target = $region17
    $region16: #{tpu_custom_call.1} parent=1 // pred_region
      %46 = dma.done [#allocation5], 16
    $region17: #{tpu_custom_call.1} parent=1 // pred_fallthru
      _
    // Predicated region
    $region18: #{tpu_custom_call.1} parent=1 // pred_check
      _
    $region19: #{tpu_custom_call.1} parent=1 // pred_check_branch
      %48 = sbr.rel (0) target = $region21
    $region20: #{tpu_custom_call.1} parent=1 // pred_region
      %49 = dma.done [#allocation3], 1024
    $region21: #{tpu_custom_call.1} parent=1 // pred_fallthru
      _
    // Predicated region
    $region22: #{tpu_custom_call.1} parent=1 // pred_check
      _
    $region23: #{tpu_custom_call.1} parent=1 // pred_check_branch
      %51 = sbr.rel (0) target = $region25
    $region24: #{tpu_custom_call.1} parent=1 // pred_region
      %52 = dma.done [#allocation8], 1024
    $region25: #{tpu_custom_call.1} parent=1 // pred_fallthru
      _
    %53 = sfence
    %s54 = sld [smem:[#allocation2]]
    %s55 = sld [smem:[#allocation2 + $0x1]]
    %s56 = sld [smem:[#allocation2 + $0x2]]
    %s57 = sld [smem:[#allocation2 + $0x3]]
    %s58 = sld [smem:[#allocation2 + $0x4]]
    %s59 = sld [smem:[#allocation2 + $0x5]]
    %s60 = sld [smem:[#allocation2 + $0x6]]
    %s61 = sld [smem:[#allocation2 + $0x7]]
    %s62 = sld [smem:[#allocation2 + $0x8]]
    %v63 = vld [vmem:[#allocation6] sm:$0xff]
    %v64 = vld [vmem:[#allocation6 + $0x8] sm:$0xff]
    %v65 = vld [vmem:[#allocation6 + $0x10] sm:$0xff]
    %v66 = vld [vmem:[#allocation6 + $0x18] sm:$0xff]
    %v67 = vld [vmem:[#allocation6 + $0x20] sm:$0xff]
    %v68 = vld [vmem:[#allocation6 + $0x28] sm:$0xff]
    %v69 = vld [vmem:[#allocation6 + $0x30] sm:$0xff]
    %v70 = vld [vmem:[#allocation6 + $0x38] sm:$0xff]
    %v71 = vld [vmem:[#allocation7] sm:$0xff]
    %v72 = vld [vmem:[#allocation7 + $0x8] sm:$0xff]
    %v73 = vld [vmem:[#allocation7 + $0x10] sm:$0xff]
    %v74 = vld [vmem:[#allocation7 + $0x18] sm:$0xff]
    %v75 = vld [vmem:[#allocation7 + $0x20] sm:$0xff]
    %v76 = vld [vmem:[#allocation7 + $0x28] sm:$0xff]
    %v77 = vld [vmem:[#allocation7 + $0x30] sm:$0xff]
    %v78 = vld [vmem:[#allocation7 + $0x38] sm:$0xff]
    %v79 = vmul.f32 %v71, 0.5
    %v80 = vmul.f32 %v72, 0.5
    %v81 = vmul.f32 %v73, 0.5
    %v82 = vmul.f32 %v74, 0.5
    %v83 = vmul.f32 %v75, 0.5
    %v84 = vmul.f32 %v76, 0.5
    %v85 = vmul.f32 %v77, 0.5
    %v86 = vmul.f32 %v78, 0.5
    %v87 = vstv %s55
    %v88 = vsub.f32 %v63, %v87
    %v89 = vsub.f32 %v64, %v87
    %v90 = vsub.f32 %v65, %v87
    %v91 = vsub.f32 %v66, %v87
    %v92 = vsub.f32 %v67, %v87
    %v93 = vsub.f32 %v68, %v87
    %v94 = vsub.f32 %v69, %v87
    %v95 = vsub.f32 %v70, %v87
    %v96 = vstv %s56
    %v97 = vmul.f32 %v88, %v96
    %v98 = vmul.f32 %v89, %v96
    %v99 = vmul.f32 %v90, %v96
    %v100 = vmul.f32 %v91, %v96
    %v101 = vmul.f32 %v92, %v96
    %v102 = vmul.f32 %v93, %v96
    %v103 = vmul.f32 %v94, %v96
    %v104 = vmul.f32 %v95, %v96
    %v105 = vxor.u32 %v97, 2147483648
    %v106 = vxor.u32 %v98, 2147483648
    %v107 = vxor.u32 %v99, 2147483648
    %v108 = vxor.u32 %v100, 2147483648
    %v109 = vxor.u32 %v101, 2147483648
    %v110 = vxor.u32 %v102, 2147483648
    %v111 = vxor.u32 %v103, 2147483648
    %v112 = vxor.u32 %v104, 2147483648
    %v113 = vmul.f32 %v105, 1.442695
    %v114 = vpow.pop %v113
    %v115 = vmul.f32 %v106, 1.442695
    %v116 = vpow.pop %v115
    %v117 = vmul.f32 %v107, 1.442695
    %v118 = vpow.pop %v117
    %v119 = vmul.f32 %v108, 1.442695
    %v120 = vpow.pop %v119
    %v121 = vmul.f32 %v109, 1.442695
    %v122 = vpow.pop %v121
    %v123 = vmul.f32 %v110, 1.442695
    %v124 = vpow.pop %v123
    %v125 = vmul.f32 %v111, 1.442695
    %v126 = vpow.pop %v125
    %v127 = vmul.f32 %v112, 1.442695
    %v128 = vpow.pop %v127
    %v129 = vadd.f32 %v114, 1.0
    %v130 = vadd.f32 %v116, 1.0
    %v131 = vadd.f32 %v118, 1.0
    %v132 = vadd.f32 %v120, 1.0
    %v133 = vadd.f32 %v122, 1.0
    %v134 = vadd.f32 %v124, 1.0
    %v135 = vadd.f32 %v126, 1.0
    %v136 = vadd.f32 %v128, 1.0
    %v137 = vrcp.pop %v129
    %v138 = vmul.f32 1.0, %v137
    %v139 = vrcp.pop %v130
    %v140 = vmul.f32 1.0, %v139
    %v141 = vrcp.pop %v131
    %v142 = vmul.f32 1.0, %v141
    %v143 = vrcp.pop %v132
    %v144 = vmul.f32 1.0, %v143
    %v145 = vrcp.pop %v133
    %v146 = vmul.f32 1.0, %v145
    %v147 = vrcp.pop %v134
    %v148 = vmul.f32 1.0, %v147
    %v149 = vrcp.pop %v135
    %v150 = vmul.f32 1.0, %v149
    %v151 = vrcp.pop %v136
    %v152 = vmul.f32 1.0, %v151
    %v153 = vmul.f32 %v138, %v63
    %v154 = vmul.f32 %v140, %v64
    %v155 = vmul.f32 %v142, %v65
    %v156 = vmul.f32 %v144, %v66
    %v157 = vmul.f32 %v146, %v67
    %v158 = vmul.f32 %v148, %v68
    %v159 = vmul.f32 %v150, %v69
    %v160 = vmul.f32 %v152, %v70
    %v161 = vsub.f32 %v153, %v87
    %v162 = vsub.f32 %v154, %v87
    %v163 = vsub.f32 %v155, %v87
    %v164 = vsub.f32 %v156, %v87
    %v165 = vsub.f32 %v157, %v87
    %v166 = vsub.f32 %v158, %v87
    %v167 = vsub.f32 %v159, %v87
    %v168 = vsub.f32 %v160, %v87
    %v169 = vmul.f32 %v161, %v96
    %v170 = vmul.f32 %v162, %v96
    %v171 = vmul.f32 %v163, %v96
    %v172 = vmul.f32 %v164, %v96
    %v173 = vmul.f32 %v165, %v96
    %v174 = vmul.f32 %v166, %v96
    %v175 = vmul.f32 %v167, %v96
    %v176 = vmul.f32 %v168, %v96
    %v177 = vxor.u32 %v169, 2147483648
    %v178 = vxor.u32 %v170, 2147483648
    %v179 = vxor.u32 %v171, 2147483648
    %v180 = vxor.u32 %v172, 2147483648
    %v181 = vxor.u32 %v173, 2147483648
    %v182 = vxor.u32 %v174, 2147483648
    %v183 = vxor.u32 %v175, 2147483648
    %v184 = vxor.u32 %v176, 2147483648
    %v185 = vmul.f32 %v177, 1.442695
    %v186 = vpow.pop %v185
    %v187 = vmul.f32 %v178, 1.442695
    %v188 = vpow.pop %v187
    %v189 = vmul.f32 %v179, 1.442695
    %v190 = vpow.pop %v189
    %v191 = vmul.f32 %v180, 1.442695
    %v192 = vpow.pop %v191
    %v193 = vmul.f32 %v181, 1.442695
    %v194 = vpow.pop %v193
    %v195 = vmul.f32 %v182, 1.442695
    %v196 = vpow.pop %v195
    %v197 = vmul.f32 %v183, 1.442695
    %v198 = vpow.pop %v197
    %v199 = vmul.f32 %v184, 1.442695
    %v200 = vpow.pop %v199
    %v201 = vadd.f32 %v186, 1.0
    %v202 = vadd.f32 %v188, 1.0
    %v203 = vadd.f32 %v190, 1.0
    %v204 = vadd.f32 %v192, 1.0
    %v205 = vadd.f32 %v194, 1.0
    %v206 = vadd.f32 %v196, 1.0
    %v207 = vadd.f32 %v198, 1.0
    %v208 = vadd.f32 %v200, 1.0
    %v209 = vrcp.pop %v201
    %v210 = vmul.f32 1.0, %v209
    %v211 = vrcp.pop %v202
    %v212 = vmul.f32 1.0, %v211
    %v213 = vrcp.pop %v203
    %v214 = vmul.f32 1.0, %v213
    %v215 = vrcp.pop %v204
    %v216 = vmul.f32 1.0, %v215
    %v217 = vrcp.pop %v205
    %v218 = vmul.f32 1.0, %v217
    %v219 = vrcp.pop %v206
    %v220 = vmul.f32 1.0, %v219
    %v221 = vrcp.pop %v207
    %v222 = vmul.f32 1.0, %v221
    %v223 = vrcp.pop %v208
    %v224 = vmul.f32 1.0, %v223
    %v225 = vxor.u32 %v153, 2147483648
    %v226 = vxor.u32 %v154, 2147483648
    %v227 = vxor.u32 %v155, 2147483648
    %v228 = vxor.u32 %v156, 2147483648
    %v229 = vxor.u32 %v157, 2147483648
    %v230 = vxor.u32 %v158, 2147483648
    %v231 = vxor.u32 %v159, 2147483648
    %v232 = vxor.u32 %v160, 2147483648
    %v233 = vmul.f32 %v225, 1.442695
    %v234 = vpow.pop %v233
    %v235 = vmul.f32 %v226, 1.442695
    %v236 = vpow.pop %v235
    %v237 = vmul.f32 %v227, 1.442695
    %v238 = vpow.pop %v237
    %v239 = vmul.f32 %v228, 1.442695
    %v240 = vpow.pop %v239
    %v241 = vmul.f32 %v229, 1.442695
    %v242 = vpow.pop %v241
    %v243 = vmul.f32 %v230, 1.442695
    %v244 = vpow.pop %v243
    %v245 = vmul.f32 %v231, 1.442695
    %v246 = vpow.pop %v245
    %v247 = vmul.f32 %v232, 1.442695
    %v248 = vpow.pop %v247
    %v249 = vadd.f32 %v234, 1.0
    %v250 = vadd.f32 %v236, 1.0
    %v251 = vadd.f32 %v238, 1.0
    %v252 = vadd.f32 %v240, 1.0
    %v253 = vadd.f32 %v242, 1.0
    %v254 = vadd.f32 %v244, 1.0
    %v255 = vadd.f32 %v246, 1.0
    %v256 = vadd.f32 %v248, 1.0
    %v257 = vrcp.pop %v249
    %v258 = vmul.f32 1.0, %v257
    %v259 = vrcp.pop %v250
    %v260 = vmul.f32 1.0, %v259
    %v261 = vrcp.pop %v251
    %v262 = vmul.f32 1.0, %v261
    %v263 = vrcp.pop %v252
    %v264 = vmul.f32 1.0, %v263
    %v265 = vrcp.pop %v253
    %v266 = vmul.f32 1.0, %v265
    %v267 = vrcp.pop %v254
    %v268 = vmul.f32 1.0, %v267
    %v269 = vrcp.pop %v255
    %v270 = vmul.f32 1.0, %v269
    %v271 = vrcp.pop %v256
    %v272 = vmul.f32 1.0, %v271
    %v273 = vmul.f32 %v210, %v258
    %v274 = vmul.f32 %v212, %v260
    %v275 = vmul.f32 %v214, %v262
    %v276 = vmul.f32 %v216, %v264
    %v277 = vmul.f32 %v218, %v266
    %v278 = vmul.f32 %v220, %v268
    %v279 = vmul.f32 %v222, %v270
    %v280 = vmul.f32 %v224, %v272
    %v281 = vmul.f32 %v273, %v273
    %v282 = vmul.f32 %v274, %v274
    %v283 = vmul.f32 %v275, %v275
    %v284 = vmul.f32 %v276, %v276
    %v285 = vmul.f32 %v277, %v277
    %v286 = vmul.f32 %v278, %v278
    %v287 = vmul.f32 %v279, %v279
    %v288 = vmul.f32 %v280, %v280
    %289 = vxpose.xlu0.b32.start [1/16] %v281, 128
    %290 = vxpose.xlu0.b32.cont [2/16] 0.0, 128
    %291 = vxpose.xlu0.b32.cont [3/16] 0.0, 128
    %292 = vxpose.xlu0.b32.cont [4/16] 0.0, 128
    %293 = vxpose.xlu0.b32.cont [5/16] 0.0, 128
    %294 = vxpose.xlu0.b32.cont [6/16] 0.0, 128
    %295 = vxpose.xlu0.b32.cont [7/16] 0.0, 128
    %296 = vxpose.xlu0.b32.cont [8/16] 0.0, 128
    %297 = vxpose.xlu0.b32.cont [9/16] 0.0, 128
    %298 = vxpose.xlu0.b32.cont [10/16] 0.0, 128
    %299 = vxpose.xlu0.b32.cont [11/16] 0.0, 128
    %300 = vxpose.xlu0.b32.cont [12/16] 0.0, 128
    %301 = vxpose.xlu0.b32.cont [13/16] 0.0, 128
    %302 = vxpose.xlu0.b32.cont [14/16] 0.0, 128
    %303 = vxpose.xlu0.b32.cont [15/16] 0.0, 128
    %304 = vxpose.xlu0.b32.end [16/16] 0.0, 128
    %v305 = vpop.trf.xlu0
    %v306 = vpop.trf.xlu0
    %v307 = vpop.trf.xlu0
    %v308 = vpop.trf.xlu0
    %v309 = vpop.trf.xlu0
    %v310 = vpop.trf.xlu0
    %v311 = vpop.trf.xlu0
    %v312 = vpop.trf.xlu0
    %v313 = vpop.trf.xlu0
    %v314 = vpop.trf.xlu0
    %v315 = vpop.trf.xlu0
    %v316 = vpop.trf.xlu0
    %v317 = vpop.trf.xlu0
    %v318 = vpop.trf.xlu0
    %v319 = vpop.trf.xlu0
    %v320 = vpop.trf.xlu0
    %321 = vxpose.xlu0.b32.start [1/16] %v282, 128
    %322 = vxpose.xlu0.b32.cont [2/16] 0.0, 128
    %323 = vxpose.xlu0.b32.cont [3/16] 0.0, 128
    %324 = vxpose.xlu0.b32.cont [4/16] 0.0, 128
    %325 = vxpose.xlu0.b32.cont [5/16] 0.0, 128
    %326 = vxpose.xlu0.b32.cont [6/16] 0.0, 128
    %327 = vxpose.xlu0.b32.cont [7/16] 0.0, 128
    %328 = vxpose.xlu0.b32.cont [8/16] 0.0, 128
    %329 = vxpose.xlu0.b32.cont [9/16] 0.0, 128
    %330 = vxpose.xlu0.b32.cont [10/16] 0.0, 128
    %331 = vxpose.xlu0.b32.cont [11/16] 0.0, 128
    %332 = vxpose.xlu0.b32.cont [12/16] 0.0, 128
    %333 = vxpose.xlu0.b32.cont [13/16] 0.0, 128
    %334 = vxpose.xlu0.b32.cont [14/16] 0.0, 128
    %335 = vxpose.xlu0.b32.cont [15/16] 0.0, 128
    %336 = vxpose.xlu0.b32.end [16/16] 0.0, 128
    %v337 = vpop.trf.xlu0
    %v338 = vpop.trf.xlu0
    %v339 = vpop.trf.xlu0
    %v340 = vpop.trf.xlu0
    %v341 = vpop.trf.xlu0
    %v342 = vpop.trf.xlu0
    %v343 = vpop.trf.xlu0
    %v344 = vpop.trf.xlu0
    %v345 = vpop.trf.xlu0
    %v346 = vpop.trf.xlu0
    %v347 = vpop.trf.xlu0
    %v348 = vpop.trf.xlu0
    %v349 = vpop.trf.xlu0
    %v350 = vpop.trf.xlu0
    %v351 = vpop.trf.xlu0
    %v352 = vpop.trf.xlu0
    %353 = vxpose.xlu0.b32.start [1/16] %v283, 128
    %354 = vxpose.xlu0.b32.cont [2/16] 0.0, 128
    %355 = vxpose.xlu0.b32.cont [3/16] 0.0, 128
    %356 = vxpose.xlu0.b32.cont [4/16] 0.0, 128
    %357 = vxpose.xlu0.b32.cont [5/16] 0.0, 128
    %358 = vxpose.xlu0.b32.cont [6/16] 0.0, 128
    %359 = vxpose.xlu0.b32.cont [7/16] 0.0, 128
    %360 = vxpose.xlu0.b32.cont [8/16] 0.0, 128
    %361 = vxpose.xlu0.b32.cont [9/16] 0.0, 128
    %362 = vxpose.xlu0.b32.cont [10/16] 0.0, 128
    %363 = vxpose.xlu0.b32.cont [11/16] 0.0, 128
    %364 = vxpose.xlu0.b32.cont [12/16] 0.0, 128
    %365 = vxpose.xlu0.b32.cont [13/16] 0.0, 128
    %366 = vxpose.xlu0.b32.cont [14/16] 0.0, 128
    %367 = vxpose.xlu0.b32.cont [15/16] 0.0, 128
    %368 = vxpose.xlu0.b32.end [16/16] 0.0, 128
    %v369 = vpop.trf.xlu0
    %v370 = vpop.trf.xlu0
    %v371 = vpop.trf.xlu0
    %v372 = vpop.trf.xlu0
    %v373 = vpop.trf.xlu0
    %v374 = vpop.trf.xlu0
    %v375 = vpop.trf.xlu0
    %v376 = vpop.trf.xlu0
    %v377 = vpop.trf.xlu0
    %v378 = vpop.trf.xlu0
    %v379 = vpop.trf.xlu0
    %v380 = vpop.trf.xlu0
    %v381 = vpop.trf.xlu0
    %v382 = vpop.trf.xlu0
    %v383 = vpop.trf.xlu0
    %v384 = vpop.trf.xlu0
    %385 = vxpose.xlu0.b32.start [1/16] %v284, 128
    %386 = vxpose.xlu0.b32.cont [2/16] 0.0, 128
    %387 = vxpose.xlu0.b32.cont [3/16] 0.0, 128
    %388 = vxpose.xlu0.b32.cont [4/16] 0.0, 128
    %389 = vxpose.xlu0.b32.cont [5/16] 0.0, 128
    %390 = vxpose.xlu0.b32.cont [6/16] 0.0, 128
    %391 = vxpose.xlu0.b32.cont [7/16] 0.0, 128
    %392 = vxpose.xlu0.b32.cont [8/16] 0.0, 128
    %393 = vxpose.xlu0.b32.cont [9/16] 0.0, 128
    %394 = vxpose.xlu0.b32.cont [10/16] 0.0, 128
    %395 = vxpose.xlu0.b32.cont [11/16] 0.0, 128
    %396 = vxpose.xlu0.b32.cont [12/16] 0.0, 128
    %397 = vxpose.xlu0.b32.cont [13/16] 0.0, 128
    %398 = vxpose.xlu0.b32.cont [14/16] 0.0, 128
    %399 = vxpose.xlu0.b32.cont [15/16] 0.0, 128
    %400 = vxpose.xlu0.b32.end [16/16] 0.0, 128
    %v401 = vpop.trf.xlu0
    %v402 = vpop.trf.xlu0
    %v403 = vpop.trf.xlu0
    %v404 = vpop.trf.xlu0
    %v405 = vpop.trf.xlu0
    %v406 = vpop.trf.xlu0
    %v407 = vpop.trf.xlu0
    %v408 = vpop.trf.xlu0
    %v409 = vpop.trf.xlu0
    %v410 = vpop.trf.xlu0
    %v411 = vpop.trf.xlu0
    %v412 = vpop.trf.xlu0
    %v413 = vpop.trf.xlu0
    %v414 = vpop.trf.xlu0
    %v415 = vpop.trf.xlu0
    %v416 = vpop.trf.xlu0
    %417 = vxpose.xlu0.b32.start [1/16] %v285, 128
    %418 = vxpose.xlu0.b32.cont [2/16] 0.0, 128
    %419 = vxpose.xlu0.b32.cont [3/16] 0.0, 128
    %420 = vxpose.xlu0.b32.cont [4/16] 0.0, 128
    %421 = vxpose.xlu0.b32.cont [5/16] 0.0, 128
    %422 = vxpose.xlu0.b32.cont [6/16] 0.0, 128
    %423 = vxpose.xlu0.b32.cont [7/16] 0.0, 128
    %424 = vxpose.xlu0.b32.cont [8/16] 0.0, 128
    %425 = vxpose.xlu0.b32.cont [9/16] 0.0, 128
    %426 = vxpose.xlu0.b32.cont [10/16] 0.0, 128
    %427 = vxpose.xlu0.b32.cont [11/16] 0.0, 128
    %428 = vxpose.xlu0.b32.cont [12/16] 0.0, 128
    %429 = vxpose.xlu0.b32.cont [13/16] 0.0, 128
    %430 = vxpose.xlu0.b32.cont [14/16] 0.0, 128
    %431 = vxpose.xlu0.b32.cont [15/16] 0.0, 128
    %432 = vxpose.xlu0.b32.end [16/16] 0.0, 128
    %v433 = vpop.trf.xlu0
    %v434 = vpop.trf.xlu0
    %v435 = vpop.trf.xlu0
    %v436 = vpop.trf.xlu0
    %v437 = vpop.trf.xlu0
    %v438 = vpop.trf.xlu0
    %v439 = vpop.trf.xlu0
    %v440 = vpop.trf.xlu0
    %v441 = vpop.trf.xlu0
    %v442 = vpop.trf.xlu0
    %v443 = vpop.trf.xlu0
    %v444 = vpop.trf.xlu0
    %v445 = vpop.trf.xlu0
    %v446 = vpop.trf.xlu0
    %v447 = vpop.trf.xlu0
    %v448 = vpop.trf.xlu0
    %449 = vxpose.xlu0.b32.start [1/16] %v286, 128
    %450 = vxpose.xlu0.b32.cont [2/16] 0.0, 128
    %451 = vxpose.xlu0.b32.cont [3/16] 0.0, 128
    %452 = vxpose.xlu0.b32.cont [4/16] 0.0, 128
    %453 = vxpose.xlu0.b32.cont [5/16] 0.0, 128
    %454 = vxpose.xlu0.b32.cont [6/16] 0.0, 128
    %455 = vxpose.xlu0.b32.cont [7/16] 0.0, 128
    %456 = vxpose.xlu0.b32.cont [8/16] 0.0, 128
    %457 = vxpose.xlu0.b32.cont [9/16] 0.0, 128
    %458 = vxpose.xlu0.b32.cont [10/16] 0.0, 128
    %459 = vxpose.xlu0.b32.cont [11/16] 0.0, 128
    %460 = vxpose.xlu0.b32.cont [12/16] 0.0, 128
    %461 = vxpose.xlu0.b32.cont [13/16] 0.0, 128
    %462 = vxpose.xlu0.b32.cont [14/16] 0.0, 128
    %463 = vxpose.xlu0.b32.cont [15/16] 0.0, 128
    %464 = vxpose.xlu0.b32.end [16/16] 0.0, 128
    %v465 = vpop.trf.xlu0
    %v466 = vpop.trf.xlu0
    %v467 = vpop.trf.xlu0
    %v468 = vpop.trf.xlu0
    %v469 = vpop.trf.xlu0
    %v470 = vpop.trf.xlu0
    %v471 = vpop.trf.xlu0
    %v472 = vpop.trf.xlu0
    %v473 = vpop.trf.xlu0
    %v474 = vpop.trf.xlu0
    %v475 = vpop.trf.xlu0
    %v476 = vpop.trf.xlu0
    %v477 = vpop.trf.xlu0
    %v478 = vpop.trf.xlu0
    %v479 = vpop.trf.xlu0
    %v480 = vpop.trf.xlu0
    %481 = vxpose.xlu0.b32.start [1/16] %v287, 128
    %482 = vxpose.xlu0.b32.cont [2/16] 0.0, 128
    %483 = vxpose.xlu0.b32.cont [3/16] 0.0, 128
    %484 = vxpose.xlu0.b32.cont [4/16] 0.0, 128
    %485 = vxpose.xlu0.b32.cont [5/16] 0.0, 128
    %486 = vxpose.xlu0.b32.cont [6/16] 0.0, 128
    %487 = vxpose.xlu0.b32.cont [7/16] 0.0, 128
    %488 = vxpose.xlu0.b32.cont [8/16] 0.0, 128
    %489 = vxpose.xlu0.b32.cont [9/16] 0.0, 128
    %490 = vxpose.xlu0.b32.cont [10/16] 0.0, 128
    %491 = vxpose.xlu0.b32.cont [11/16] 0.0, 128
    %492 = vxpose.xlu0.b32.cont [12/16] 0.0, 128
    %493 = vxpose.xlu0.b32.cont [13/16] 0.0, 128
    %494 = vxpose.xlu0.b32.cont [14/16] 0.0, 128
    %495 = vxpose.xlu0.b32.cont [15/16] 0.0, 128
    %496 = vxpose.xlu0.b32.end [16/16] 0.0, 128
    %v497 = vpop.trf.xlu0
    %v498 = vpop.trf.xlu0
    %v499 = vpop.trf.xlu0
    %v500 = vpop.trf.xlu0
    %v501 = vpop.trf.xlu0
    %v502 = vpop.trf.xlu0
    %v503 = vpop.trf.xlu0
    %v504 = vpop.trf.xlu0
    %v505 = vpop.trf.xlu0
    %v506 = vpop.trf.xlu0
    %v507 = vpop.trf.xlu0
    %v508 = vpop.trf.xlu0
    %v509 = vpop.trf.xlu0
    %v510 = vpop.trf.xlu0
    %v511 = vpop.trf.xlu0
    %v512 = vpop.trf.xlu0
    %513 = vxpose.xlu0.b32.start [1/16] %v288, 128
    %514 = vxpose.xlu0.b32.cont [2/16] 0.0, 128
    %515 = vxpose.xlu0.b32.cont [3/16] 0.0, 128
    %516 = vxpose.xlu0.b32.cont [4/16] 0.0, 128
    %517 = vxpose.xlu0.b32.cont [5/16] 0.0, 128
    %518 = vxpose.xlu0.b32.cont [6/16] 0.0, 128
    %519 = vxpose.xlu0.b32.cont [7/16] 0.0, 128
    %520 = vxpose.xlu0.b32.cont [8/16] 0.0, 128
    %521 = vxpose.xlu0.b32.cont [9/16] 0.0, 128
    %522 = vxpose.xlu0.b32.cont [10/16] 0.0, 128
    %523 = vxpose.xlu0.b32.cont [11/16] 0.0, 128
    %524 = vxpose.xlu0.b32.cont [12/16] 0.0, 128
    %525 = vxpose.xlu0.b32.cont [13/16] 0.0, 128
    %526 = vxpose.xlu0.b32.cont [14/16] 0.0, 128
    %527 = vxpose.xlu0.b32.cont [15/16] 0.0, 128
    %528 = vxpose.xlu0.b32.end [16/16] 0.0, 128
    %v529 = vpop.trf.xlu0
    %v530 = vpop.trf.xlu0
    %v531 = vpop.trf.xlu0
    %v532 = vpop.trf.xlu0
    %v533 = vpop.trf.xlu0
    %v534 = vpop.trf.xlu0
    %v535 = vpop.trf.xlu0
    %v536 = vpop.trf.xlu0
    %v537 = vpop.trf.xlu0
    %v538 = vpop.trf.xlu0
    %v539 = vpop.trf.xlu0
    %v540 = vpop.trf.xlu0
    %v541 = vpop.trf.xlu0
    %v542 = vpop.trf.xlu0
    %v543 = vpop.trf.xlu0
    %v544 = vpop.trf.xlu0
    %v545 = vadd.f32 %v281, %v305
    %v546 = vadd.f32 %v282, %v337
    %v547 = vadd.f32 %v283, %v369
    %v548 = vadd.f32 %v284, %v401
    %v549 = vadd.f32 %v285, %v433
    %v550 = vadd.f32 %v286, %v465
    %v551 = vadd.f32 %v287, %v497
    %v552 = vadd.f32 %v288, %v529
    %v553 = vmul.f32 %v545, %v79
    %v554 = vmul.f32 %v546, %v80
    %v555 = vmul.f32 %v547, %v81
    %v556 = vmul.f32 %v548, %v82
    %v557 = vmul.f32 %v549, %v83
    %v558 = vmul.f32 %v550, %v84
    %v559 = vmul.f32 %v551, %v85
    %v560 = vmul.f32 %v552, %v86
    %vm561 = vcmask 64512
    %v562 = vsel %vm561, %v553, 0.0
    %v563 = vrot.slane %v562, 4
    %v564 = vadd.f32 %v562, %v563
    %v565 = vrot.slane %v564, 2
    %v566 = vadd.f32 %v564, %v565
    %v567 = vrot.slane %v566, 1
    %v568 = vadd.f32 %v566, %v567
    %v569 = vsel %vm561, %v554, 0.0
    %v570 = vrot.slane %v569, 4
    %v571 = vadd.f32 %v569, %v570
    %v572 = vrot.slane %v571, 2
    %v573 = vadd.f32 %v571, %v572
    %v574 = vrot.slane %v573, 1
    %v575 = vadd.f32 %v573, %v574
    %v576 = vsel %vm561, %v555, 0.0
    %v577 = vrot.slane %v576, 4
    %v578 = vadd.f32 %v576, %v577
    %v579 = vrot.slane %v578, 2
    %v580 = vadd.f32 %v578, %v579
    %v581 = vrot.slane %v580, 1
    %v582 = vadd.f32 %v580, %v581
    %v583 = vsel %vm561, %v556, 0.0
    %v584 = vrot.slane %v583, 4
    %v585 = vadd.f32 %v583, %v584
    %v586 = vrot.slane %v585, 2
    %v587 = vadd.f32 %v585, %v586
    %v588 = vrot.slane %v587, 1
    %v589 = vadd.f32 %v587, %v588
    %v590 = vsel %vm561, %v557, 0.0
    %v591 = vrot.slane %v590, 4
    %v592 = vadd.f32 %v590, %v591
    %v593 = vrot.slane %v592, 2
    %v594 = vadd.f32 %v592, %v593
    %v595 = vrot.slane %v594, 1
    %v596 = vadd.f32 %v594, %v595
    %v597 = vsel %vm561, %v558, 0.0
    %v598 = vrot.slane %v597, 4
    %v599 = vadd.f32 %v597, %v598
    %v600 = vrot.slane %v599, 2
    %v601 = vadd.f32 %v599, %v600
    %v602 = vrot.slane %v601, 1
    %v603 = vadd.f32 %v601, %v602
    %v604 = vsel %vm561, %v559, 0.0
    %v605 = vrot.slane %v604, 4
    %v606 = vadd.f32 %v604, %v605
    %v607 = vrot.slane %v606, 2
    %v608 = vadd.f32 %v606, %v607
    %v609 = vrot.slane %v608, 1
    %v610 = vadd.f32 %v608, %v609
    %v611 = vsel %vm561, %v560, 0.0
    %v612 = vrot.slane %v611, 4
    %v613 = vadd.f32 %v611, %v612
    %v614 = vrot.slane %v613, 2
    %v615 = vadd.f32 %v613, %v614
    %v616 = vrot.slane %v615, 1
    %v617 = vadd.f32 %v615, %v616
    %v618 = vsub.f32 %v568, 1.0
    %v619 = vsub.f32 %v575, 1.0
    %v620 = vsub.f32 %v582, 1.0
    %v621 = vsub.f32 %v589, 1.0
    %v622 = vsub.f32 %v596, 1.0
    %v623 = vsub.f32 %v603, 1.0
    %v624 = vsub.f32 %v610, 1.0
    %v625 = vsub.f32 %v617, 1.0
    %v626 = vmax.f32 %v618, 0.0
    %v627 = vmax.f32 %v619, 0.0
    %v628 = vmax.f32 %v620, 0.0
    %v629 = vmax.f32 %v621, 0.0
    %v630 = vmax.f32 %v622, 0.0
    %v631 = vmax.f32 %v623, 0.0
    %v632 = vmax.f32 %v624, 0.0
    %v633 = vmax.f32 %v625, 0.0
    %v634 = vstv %s54
    %v635 = vmul.f32 %v634, %v626
    %v636 = vmul.f32 %v634, %v627
    %v637 = vmul.f32 %v634, %v628
    %v638 = vmul.f32 %v634, %v629
    %v639 = vmul.f32 %v634, %v630
    %v640 = vmul.f32 %v634, %v631
    %v641 = vmul.f32 %v634, %v632
    %v642 = vmul.f32 %v634, %v633
    %643 = vxpose.xlu0.b32.start [1/16] %v153, 128
    %644 = vxpose.xlu0.b32.cont [2/16] 0.0, 128
    %645 = vxpose.xlu0.b32.cont [3/16] 0.0, 128
    %646 = vxpose.xlu0.b32.cont [4/16] 0.0, 128
    %647 = vxpose.xlu0.b32.cont [5/16] 0.0, 128
    %648 = vxpose.xlu0.b32.cont [6/16] 0.0, 128
    %649 = vxpose.xlu0.b32.cont [7/16] 0.0, 128
    %650 = vxpose.xlu0.b32.cont [8/16] 0.0, 128
    %651 = vxpose.xlu0.b32.cont [9/16] 0.0, 128
    %652 = vxpose.xlu0.b32.cont [10/16] 0.0, 128
    %653 = vxpose.xlu0.b32.cont [11/16] 0.0, 128
    %654 = vxpose.xlu0.b32.cont [12/16] 0.0, 128
    %655 = vxpose.xlu0.b32.cont [13/16] 0.0, 128
    %656 = vxpose.xlu0.b32.cont [14/16] 0.0, 128
    %657 = vxpose.xlu0.b32.cont [15/16] 0.0, 128
    %658 = vxpose.xlu0.b32.end [16/16] 0.0, 128
    %v659 = vpop.trf.xlu0
    %v660 = vpop.trf.xlu0
    %v661 = vpop.trf.xlu0
    %v662 = vpop.trf.xlu0
    %v663 = vpop.trf.xlu0
    %v664 = vpop.trf.xlu0
    %v665 = vpop.trf.xlu0
    %v666 = vpop.trf.xlu0
    %v667 = vpop.trf.xlu0
    %v668 = vpop.trf.xlu0
    %v669 = vpop.trf.xlu0
    %v670 = vpop.trf.xlu0
    %v671 = vpop.trf.xlu0
    %v672 = vpop.trf.xlu0
    %v673 = vpop.trf.xlu0
    %v674 = vpop.trf.xlu0
    %675 = vxpose.xlu0.b32.start [1/16] %v154, 128
    %676 = vxpose.xlu0.b32.cont [2/16] 0.0, 128
    %677 = vxpose.xlu0.b32.cont [3/16] 0.0, 128
    %678 = vxpose.xlu0.b32.cont [4/16] 0.0, 128
    %679 = vxpose.xlu0.b32.cont [5/16] 0.0, 128
    %680 = vxpose.xlu0.b32.cont [6/16] 0.0, 128
    %681 = vxpose.xlu0.b32.cont [7/16] 0.0, 128
    %682 = vxpose.xlu0.b32.cont [8/16] 0.0, 128
    %683 = vxpose.xlu0.b32.cont [9/16] 0.0, 128
    %684 = vxpose.xlu0.b32.cont [10/16] 0.0, 128
    %685 = vxpose.xlu0.b32.cont [11/16] 0.0, 128
    %686 = vxpose.xlu0.b32.cont [12/16] 0.0, 128
    %687 = vxpose.xlu0.b32.cont [13/16] 0.0, 128
    %688 = vxpose.xlu0.b32.cont [14/16] 0.0, 128
    %689 = vxpose.xlu0.b32.cont [15/16] 0.0, 128
    %690 = vxpose.xlu0.b32.end [16/16] 0.0, 128
    %v691 = vpop.trf.xlu0
    %v692 = vpop.trf.xlu0
    %v693 = vpop.trf.xlu0
    %v694 = vpop.trf.xlu0
    %v695 = vpop.trf.xlu0
    %v696 = vpop.trf.xlu0
    %v697 = vpop.trf.xlu0
    %v698 = vpop.trf.xlu0
    %v699 = vpop.trf.xlu0
    %v700 = vpop.trf.xlu0
    %v701 = vpop.trf.xlu0
    %v702 = vpop.trf.xlu0
    %v703 = vpop.trf.xlu0
    %v704 = vpop.trf.xlu0
    %v705 = vpop.trf.xlu0
    %v706 = vpop.trf.xlu0
    %707 = vxpose.xlu0.b32.start [1/16] %v155, 128
    %708 = vxpose.xlu0.b32.cont [2/16] 0.0, 128
    %709 = vxpose.xlu0.b32.cont [3/16] 0.0, 128
    %710 = vxpose.xlu0.b32.cont [4/16] 0.0, 128
    %711 = vxpose.xlu0.b32.cont [5/16] 0.0, 128
    %712 = vxpose.xlu0.b32.cont [6/16] 0.0, 128
    %713 = vxpose.xlu0.b32.cont [7/16] 0.0, 128
    %714 = vxpose.xlu0.b32.cont [8/16] 0.0, 128
    %715 = vxpose.xlu0.b32.cont [9/16] 0.0, 128
    %716 = vxpose.xlu0.b32.cont [10/16] 0.0, 128
    %717 = vxpose.xlu0.b32.cont [11/16] 0.0, 128
    %718 = vxpose.xlu0.b32.cont [12/16] 0.0, 128
    %719 = vxpose.xlu0.b32.cont [13/16] 0.0, 128
    %720 = vxpose.xlu0.b32.cont [14/16] 0.0, 128
    %721 = vxpose.xlu0.b32.cont [15/16] 0.0, 128
    %722 = vxpose.xlu0.b32.end [16/16] 0.0, 128
    %v723 = vpop.trf.xlu0
    %v724 = vpop.trf.xlu0
    %v725 = vpop.trf.xlu0
    %v726 = vpop.trf.xlu0
    %v727 = vpop.trf.xlu0
    %v728 = vpop.trf.xlu0
    %v729 = vpop.trf.xlu0
    %v730 = vpop.trf.xlu0
    %v731 = vpop.trf.xlu0
    %v732 = vpop.trf.xlu0
    %v733 = vpop.trf.xlu0
    %v734 = vpop.trf.xlu0
    %v735 = vpop.trf.xlu0
    %v736 = vpop.trf.xlu0
    %v737 = vpop.trf.xlu0
    %v738 = vpop.trf.xlu0
    %739 = vxpose.xlu0.b32.start [1/16] %v156, 128
    %740 = vxpose.xlu0.b32.cont [2/16] 0.0, 128
    %741 = vxpose.xlu0.b32.cont [3/16] 0.0, 128
    %742 = vxpose.xlu0.b32.cont [4/16] 0.0, 128
    %743 = vxpose.xlu0.b32.cont [5/16] 0.0, 128
    %744 = vxpose.xlu0.b32.cont [6/16] 0.0, 128
    %745 = vxpose.xlu0.b32.cont [7/16] 0.0, 128
    %746 = vxpose.xlu0.b32.cont [8/16] 0.0, 128
    %747 = vxpose.xlu0.b32.cont [9/16] 0.0, 128
    %748 = vxpose.xlu0.b32.cont [10/16] 0.0, 128
    %749 = vxpose.xlu0.b32.cont [11/16] 0.0, 128
    %750 = vxpose.xlu0.b32.cont [12/16] 0.0, 128
    %751 = vxpose.xlu0.b32.cont [13/16] 0.0, 128
    %752 = vxpose.xlu0.b32.cont [14/16] 0.0, 128
    %753 = vxpose.xlu0.b32.cont [15/16] 0.0, 128
    %754 = vxpose.xlu0.b32.end [16/16] 0.0, 128
    %v755 = vpop.trf.xlu0
    %v756 = vpop.trf.xlu0
    %v757 = vpop.trf.xlu0
    %v758 = vpop.trf.xlu0
    %v759 = vpop.trf.xlu0
    %v760 = vpop.trf.xlu0
    %v761 = vpop.trf.xlu0
    %v762 = vpop.trf.xlu0
    %v763 = vpop.trf.xlu0
    %v764 = vpop.trf.xlu0
    %v765 = vpop.trf.xlu0
    %v766 = vpop.trf.xlu0
    %v767 = vpop.trf.xlu0
    %v768 = vpop.trf.xlu0
    %v769 = vpop.trf.xlu0
    %v770 = vpop.trf.xlu0
    %771 = vxpose.xlu0.b32.start [1/16] %v157, 128
    %772 = vxpose.xlu0.b32.cont [2/16] 0.0, 128
    %773 = vxpose.xlu0.b32.cont [3/16] 0.0, 128
    %774 = vxpose.xlu0.b32.cont [4/16] 0.0, 128
    %775 = vxpose.xlu0.b32.cont [5/16] 0.0, 128
    %776 = vxpose.xlu0.b32.cont [6/16] 0.0, 128
    %777 = vxpose.xlu0.b32.cont [7/16] 0.0, 128
    %778 = vxpose.xlu0.b32.cont [8/16] 0.0, 128
    %779 = vxpose.xlu0.b32.cont [9/16] 0.0, 128
    %780 = vxpose.xlu0.b32.cont [10/16] 0.0, 128
    %781 = vxpose.xlu0.b32.cont [11/16] 0.0, 128
    %782 = vxpose.xlu0.b32.cont [12/16] 0.0, 128
    %783 = vxpose.xlu0.b32.cont [13/16] 0.0, 128
    %784 = vxpose.xlu0.b32.cont [14/16] 0.0, 128
    %785 = vxpose.xlu0.b32.cont [15/16] 0.0, 128
    %786 = vxpose.xlu0.b32.end [16/16] 0.0, 128
    %v787 = vpop.trf.xlu0
    %v788 = vpop.trf.xlu0
    %v789 = vpop.trf.xlu0
    %v790 = vpop.trf.xlu0
    %v791 = vpop.trf.xlu0
    %v792 = vpop.trf.xlu0
    %v793 = vpop.trf.xlu0
    %v794 = vpop.trf.xlu0
    %v795 = vpop.trf.xlu0
    %v796 = vpop.trf.xlu0
    %v797 = vpop.trf.xlu0
    %v798 = vpop.trf.xlu0
    %v799 = vpop.trf.xlu0
    %v800 = vpop.trf.xlu0
    %v801 = vpop.trf.xlu0
    %v802 = vpop.trf.xlu0
    %803 = vxpose.xlu0.b32.start [1/16] %v158, 128
    %804 = vxpose.xlu0.b32.cont [2/16] 0.0, 128
    %805 = vxpose.xlu0.b32.cont [3/16] 0.0, 128
    %806 = vxpose.xlu0.b32.cont [4/16] 0.0, 128
    %807 = vxpose.xlu0.b32.cont [5/16] 0.0, 128
    %808 = vxpose.xlu0.b32.cont [6/16] 0.0, 128
    %809 = vxpose.xlu0.b32.cont [7/16] 0.0, 128
    %810 = vxpose.xlu0.b32.cont [8/16] 0.0, 128
    %811 = vxpose.xlu0.b32.cont [9/16] 0.0, 128
    %812 = vxpose.xlu0.b32.cont [10/16] 0.0, 128
    %813 = vxpose.xlu0.b32.cont [11/16] 0.0, 128
    %814 = vxpose.xlu0.b32.cont [12/16] 0.0, 128
    %815 = vxpose.xlu0.b32.cont [13/16] 0.0, 128
    %816 = vxpose.xlu0.b32.cont [14/16] 0.0, 128
    %817 = vxpose.xlu0.b32.cont [15/16] 0.0, 128
    %818 = vxpose.xlu0.b32.end [16/16] 0.0, 128
    %v819 = vpop.trf.xlu0
    %v820 = vpop.trf.xlu0
    %v821 = vpop.trf.xlu0
    %v822 = vpop.trf.xlu0
    %v823 = vpop.trf.xlu0
    %v824 = vpop.trf.xlu0
    %v825 = vpop.trf.xlu0
    %v826 = vpop.trf.xlu0
    %v827 = vpop.trf.xlu0
    %v828 = vpop.trf.xlu0
    %v829 = vpop.trf.xlu0
    %v830 = vpop.trf.xlu0
    %v831 = vpop.trf.xlu0
    %v832 = vpop.trf.xlu0
    %v833 = vpop.trf.xlu0
    %v834 = vpop.trf.xlu0
    %835 = vxpose.xlu0.b32.start [1/16] %v159, 128
    %836 = vxpose.xlu0.b32.cont [2/16] 0.0, 128
    %837 = vxpose.xlu0.b32.cont [3/16] 0.0, 128
    %838 = vxpose.xlu0.b32.cont [4/16] 0.0, 128
    %839 = vxpose.xlu0.b32.cont [5/16] 0.0, 128
    %840 = vxpose.xlu0.b32.cont [6/16] 0.0, 128
    %841 = vxpose.xlu0.b32.cont [7/16] 0.0, 128
    %842 = vxpose.xlu0.b32.cont [8/16] 0.0, 128
    %843 = vxpose.xlu0.b32.cont [9/16] 0.0, 128
    %844 = vxpose.xlu0.b32.cont [10/16] 0.0, 128
    %845 = vxpose.xlu0.b32.cont [11/16] 0.0, 128
    %846 = vxpose.xlu0.b32.cont [12/16] 0.0, 128
    %847 = vxpose.xlu0.b32.cont [13/16] 0.0, 128
    %848 = vxpose.xlu0.b32.cont [14/16] 0.0, 128
    %849 = vxpose.xlu0.b32.cont [15/16] 0.0, 128
    %850 = vxpose.xlu0.b32.end [16/16] 0.0, 128
    %v851 = vpop.trf.xlu0
    %v852 = vpop.trf.xlu0
    %v853 = vpop.trf.xlu0
    %v854 = vpop.trf.xlu0
    %v855 = vpop.trf.xlu0
    %v856 = vpop.trf.xlu0
    %v857 = vpop.trf.xlu0
    %v858 = vpop.trf.xlu0
    %v859 = vpop.trf.xlu0
    %v860 = vpop.trf.xlu0
    %v861 = vpop.trf.xlu0
    %v862 = vpop.trf.xlu0
    %v863 = vpop.trf.xlu0
    %v864 = vpop.trf.xlu0
    %v865 = vpop.trf.xlu0
    %v866 = vpop.trf.xlu0
    %867 = vxpose.xlu0.b32.start [1/16] %v160, 128
    %868 = vxpose.xlu0.b32.cont [2/16] 0.0, 128
    %869 = vxpose.xlu0.b32.cont [3/16] 0.0, 128
    %870 = vxpose.xlu0.b32.cont [4/16] 0.0, 128
    %871 = vxpose.xlu0.b32.cont [5/16] 0.0, 128
    %872 = vxpose.xlu0.b32.cont [6/16] 0.0, 128
    %873 = vxpose.xlu0.b32.cont [7/16] 0.0, 128
    %874 = vxpose.xlu0.b32.cont [8/16] 0.0, 128
    %875 = vxpose.xlu0.b32.cont [9/16] 0.0, 128
    %876 = vxpose.xlu0.b32.cont [10/16] 0.0, 128
    %877 = vxpose.xlu0.b32.cont [11/16] 0.0, 128
    %878 = vxpose.xlu0.b32.cont [12/16] 0.0, 128
    %879 = vxpose.xlu0.b32.cont [13/16] 0.0, 128
    %880 = vxpose.xlu0.b32.cont [14/16] 0.0, 128
    %881 = vxpose.xlu0.b32.cont [15/16] 0.0, 128
    %882 = vxpose.xlu0.b32.end [16/16] 0.0, 128
    %v883 = vpop.trf.xlu0
    %v884 = vpop.trf.xlu0
    %v885 = vpop.trf.xlu0
    %v886 = vpop.trf.xlu0
    %v887 = vpop.trf.xlu0
    %v888 = vpop.trf.xlu0
    %v889 = vpop.trf.xlu0
    %v890 = vpop.trf.xlu0
    %v891 = vpop.trf.xlu0
    %v892 = vpop.trf.xlu0
    %v893 = vpop.trf.xlu0
    %v894 = vpop.trf.xlu0
    %v895 = vpop.trf.xlu0
    %v896 = vpop.trf.xlu0
    %v897 = vpop.trf.xlu0
    %v898 = vpop.trf.xlu0
    %v899 = vadd.f32 %v153, %v659
    %v900 = vadd.f32 %v154, %v691
    %v901 = vadd.f32 %v155, %v723
    %v902 = vadd.f32 %v156, %v755
    %v903 = vadd.f32 %v157, %v787
    %v904 = vadd.f32 %v158, %v819
    %v905 = vadd.f32 %v159, %v851
    %v906 = vadd.f32 %v160, %v883
    %v907 = vmul.f32 %v899, 0.5
    %v908 = vmul.f32 %v900, 0.5
    %v909 = vmul.f32 %v901, 0.5
    %v910 = vmul.f32 %v902, 0.5
    %v911 = vmul.f32 %v903, 0.5
    %v912 = vmul.f32 %v904, 0.5
    %v913 = vmul.f32 %v905, 0.5
    %v914 = vmul.f32 %v906, 0.5
    %s915 = smul.f32 %s57, %s59
    %s916 = smul.f32 %s61, %s915
    %s917 = smul.f32 %s58, %s60
    %v918 = vstv %s915
    %v919 = vmul.f32 %v918, %v71
    %v920 = vmul.f32 %v918, %v72
    %v921 = vmul.f32 %v918, %v73
    %v922 = vmul.f32 %v918, %v74
    %v923 = vmul.f32 %v918, %v75
    %v924 = vmul.f32 %v918, %v76
    %v925 = vmul.f32 %v918, %v77
    %v926 = vmul.f32 %v918, %v78
    %v927 = vstv %s62
    %v928 = vmul.f32 %v618, %v927
    %v929 = vmul.f32 %v619, %v927
    %v930 = vmul.f32 %v620, %v927
    %v931 = vmul.f32 %v621, %v927
    %v932 = vmul.f32 %v622, %v927
    %v933 = vmul.f32 %v623, %v927
    %v934 = vmul.f32 %v624, %v927
    %v935 = vmul.f32 %v625, %v927
    %v936 = vxor.u32 %v928, 2147483648
    %v937 = vxor.u32 %v929, 2147483648
    %v938 = vxor.u32 %v930, 2147483648
    %v939 = vxor.u32 %v931, 2147483648
    %v940 = vxor.u32 %v932, 2147483648
    %v941 = vxor.u32 %v933, 2147483648
    %v942 = vxor.u32 %v934, 2147483648
    %v943 = vxor.u32 %v935, 2147483648
    %v944 = vmul.f32 %v936, 1.442695
    %v945 = vpow.pop %v944
    %v946 = vmul.f32 %v937, 1.442695
    %v947 = vpow.pop %v946
    %v948 = vmul.f32 %v938, 1.442695
    %v949 = vpow.pop %v948
    %v950 = vmul.f32 %v939, 1.442695
    %v951 = vpow.pop %v950
    %v952 = vmul.f32 %v940, 1.442695
    %v953 = vpow.pop %v952
    %v954 = vmul.f32 %v941, 1.442695
    %v955 = vpow.pop %v954
    %v956 = vmul.f32 %v942, 1.442695
    %v957 = vpow.pop %v956
    %v958 = vmul.f32 %v943, 1.442695
    %v959 = vpow.pop %v958
    %v960 = vadd.f32 %v945, 1.0
    %v961 = vadd.f32 %v947, 1.0
    %v962 = vadd.f32 %v949, 1.0
    %v963 = vadd.f32 %v951, 1.0
    %v964 = vadd.f32 %v953, 1.0
    %v965 = vadd.f32 %v955, 1.0
    %v966 = vadd.f32 %v957, 1.0
    %v967 = vadd.f32 %v959, 1.0
    %v968 = vrcp.pop %v960
    %v969 = vmul.f32 1.0, %v968
    %v970 = vrcp.pop %v961
    %v971 = vmul.f32 1.0, %v970
    %v972 = vrcp.pop %v962
    %v973 = vmul.f32 1.0, %v972
    %v974 = vrcp.pop %v963
    %v975 = vmul.f32 1.0, %v974
    %v976 = vrcp.pop %v964
    %v977 = vmul.f32 1.0, %v976
    %v978 = vrcp.pop %v965
    %v979 = vmul.f32 1.0, %v978
    %v980 = vrcp.pop %v966
    %v981 = vmul.f32 1.0, %v980
    %v982 = vrcp.pop %v967
    %v983 = vmul.f32 1.0, %v982
    %v984 = vmul.f32 %v635, %v969
    %v985 = vmul.f32 %v636, %v971
    %v986 = vmul.f32 %v637, %v973
    %v987 = vmul.f32 %v638, %v975
    %v988 = vmul.f32 %v639, %v977
    %v989 = vmul.f32 %v640, %v979
    %v990 = vmul.f32 %v641, %v981
    %v991 = vmul.f32 %v642, %v983
    %vm1000 = vcmask 1041409
    %v1001 = vsel %vm1000, %v985, %v984
    %vm1002 = vcmask 1042434
    %v1003 = vsel %vm1002, %v986, %v1001
    %vm1004 = vcmask 1043459
    %v1005 = vsel %vm1004, %v987, %v1003
    %vm1006 = vcmask 1044484
    %v1007 = vsel %vm1006, %v988, %v1005
    %vm1008 = vcmask 1045509
    %v1009 = vsel %vm1008, %v989, %v1007
    %vm1010 = vcmask 1046534
    %v1011 = vsel %vm1010, %v990, %v1009
    %vm1012 = vcmask 1047559
    %v1013 = vsel %vm1012, %v991, %v1011
    %v1015 = vsel %vm561, %v1013, 0.0
    %1016 = vadd.xlane.f32.xlu0 %v1015
    %v1017 = vpop.xlane.xlu0 %1016
    %1018 = vxpose.xlu0.b32.start [1/16] %v1017, 128
    %1019 = vxpose.xlu0.b32.cont [2/16] 0.0, 128
    %1020 = vxpose.xlu0.b32.cont [3/16] 0.0, 128
    %1021 = vxpose.xlu0.b32.cont [4/16] 0.0, 128
    %1022 = vxpose.xlu0.b32.cont [5/16] 0.0, 128
    %1023 = vxpose.xlu0.b32.cont [6/16] 0.0, 128
    %1024 = vxpose.xlu0.b32.cont [7/16] 0.0, 128
    %1025 = vxpose.xlu0.b32.cont [8/16] 0.0, 128
    %1026 = vxpose.xlu0.b32.cont [9/16] 0.0, 128
    %1027 = vxpose.xlu0.b32.cont [10/16] 0.0, 128
    %1028 = vxpose.xlu0.b32.cont [11/16] 0.0, 128
    %1029 = vxpose.xlu0.b32.cont [12/16] 0.0, 128
    %1030 = vxpose.xlu0.b32.cont [13/16] 0.0, 128
    %1031 = vxpose.xlu0.b32.cont [14/16] 0.0, 128
    %1032 = vxpose.xlu0.b32.cont [15/16] 0.0, 128
    %1033 = vxpose.xlu0.b32.end [16/16] 0.0, 128
    %v1034 = vpop.trf.xlu0
    %v1035 = vpop.trf.xlu0
    %v1036 = vpop.trf.xlu0
    %v1037 = vpop.trf.xlu0
    %v1038 = vpop.trf.xlu0
    %v1039 = vpop.trf.xlu0
    %v1040 = vpop.trf.xlu0
    %v1041 = vpop.trf.xlu0
    %v1042 = vpop.trf.xlu0
    %v1043 = vpop.trf.xlu0
    %v1044 = vpop.trf.xlu0
    %v1045 = vpop.trf.xlu0
    %v1046 = vpop.trf.xlu0
    %v1047 = vpop.trf.xlu0
    %v1048 = vpop.trf.xlu0
    %v1049 = vpop.trf.xlu0
    %v1050 = vsub.f32 %v907, %v1017
    %v1051 = vsub.f32 %v908, %v1017
    %v1052 = vsub.f32 %v909, %v1017
    %v1053 = vsub.f32 %v910, %v1017
    %v1054 = vsub.f32 %v911, %v1017
    %v1055 = vsub.f32 %v912, %v1017
    %v1056 = vsub.f32 %v913, %v1017
    %v1057 = vsub.f32 %v914, %v1017
    %v1058 = vlaneseq
    %v1059 = vshrl.u32 %v1058, 7
    %v1060 = vsub.s32 0, %v1059
    %v1061 = vrot.slane %v1034, %v1060
    %v1062 = vsub.f32 %v1050, %v1061
    %v1063 = vsub.f32 %v1051, %v1061
    %v1064 = vsub.f32 %v1052, %v1061
    %v1065 = vsub.f32 %v1053, %v1061
    %v1066 = vsub.f32 %v1054, %v1061
    %v1067 = vsub.f32 %v1055, %v1061
    %v1068 = vsub.f32 %v1056, %v1061
    %v1069 = vsub.f32 %v1057, %v1061
    %v1070 = vmul.f32 %v273, %v919
    %v1071 = vmul.f32 %v274, %v920
    %v1072 = vmul.f32 %v275, %v921
    %v1073 = vmul.f32 %v276, %v922
    %v1074 = vmul.f32 %v277, %v923
    %v1075 = vmul.f32 %v278, %v924
    %v1076 = vmul.f32 %v279, %v925
    %v1077 = vmul.f32 %v280, %v926
    %v1078 = vmul.f32 %v1070, %v1062
    %v1079 = vmul.f32 %v1071, %v1063
    %v1080 = vmul.f32 %v1072, %v1064
    %v1081 = vmul.f32 %v1073, %v1065
    %v1082 = vmul.f32 %v1074, %v1066
    %v1083 = vmul.f32 %v1075, %v1067
    %v1084 = vmul.f32 %v1076, %v1068
    %v1085 = vmul.f32 %v1077, %v1069
    %v1086 = vadd.f32 %v273, %v1078
    %v1087 = vadd.f32 %v274, %v1079
    %v1088 = vadd.f32 %v275, %v1080
    %v1089 = vadd.f32 %v276, %v1081
    %v1090 = vadd.f32 %v277, %v1082
    %v1091 = vadd.f32 %v278, %v1083
    %v1092 = vadd.f32 %v279, %v1084
    %v1093 = vadd.f32 %v280, %v1085
    %v1094 = vand.u32 2147483647, %v1086
    %v1095 = vand.u32 2147483647, %v1087
    %v1096 = vand.u32 2147483647, %v1088
    %v1097 = vand.u32 2147483647, %v1089
    %v1098 = vand.u32 2147483647, %v1090
    %v1099 = vand.u32 2147483647, %v1091
    %v1100 = vand.u32 2147483647, %v1092
    %v1101 = vand.u32 2147483647, %v1093
    %v1102 = vstv %s916
    %v1103 = vsub.f32 %v1094, %v1102
    %v1104 = vsub.f32 %v1095, %v1102
    %v1105 = vsub.f32 %v1096, %v1102
    %v1106 = vsub.f32 %v1097, %v1102
    %v1107 = vsub.f32 %v1098, %v1102
    %v1108 = vsub.f32 %v1099, %v1102
    %v1109 = vsub.f32 %v1100, %v1102
    %v1110 = vsub.f32 %v1101, %v1102
    %v1111 = vmax.f32 %v1103, 0.0
    %v1112 = vmax.f32 %v1104, 0.0
    %v1113 = vmax.f32 %v1105, 0.0
    %v1114 = vmax.f32 %v1106, 0.0
    %v1115 = vmax.f32 %v1107, 0.0
    %v1116 = vmax.f32 %v1108, 0.0
    %v1117 = vmax.f32 %v1109, 0.0
    %v1118 = vmax.f32 %v1110, 0.0
    %v1119 = vmin.f32 %v1111, 1.0
    %v1120 = vmin.f32 %v1112, 1.0
    %v1121 = vmin.f32 %v1113, 1.0
    %v1122 = vmin.f32 %v1114, 1.0
    %v1123 = vmin.f32 %v1115, 1.0
    %v1124 = vmin.f32 %v1116, 1.0
    %v1125 = vmin.f32 %v1117, 1.0
    %v1126 = vmin.f32 %v1118, 1.0
    %v1127 = vmul.f32 %v1119, %v1119
    %v1128 = vmul.f32 %v1120, %v1120
    %v1129 = vmul.f32 %v1121, %v1121
    %v1130 = vmul.f32 %v1122, %v1122
    %v1131 = vmul.f32 %v1123, %v1123
    %v1132 = vmul.f32 %v1124, %v1124
    %v1133 = vmul.f32 %v1125, %v1125
    %v1134 = vmul.f32 %v1126, %v1126
    %1135 = vxpose.xlu0.b32.start [1/16] %v1127, 128
    %1136 = vxpose.xlu0.b32.cont [2/16] 0.0, 128
    %1137 = vxpose.xlu0.b32.cont [3/16] 0.0, 128
    %1138 = vxpose.xlu0.b32.cont [4/16] 0.0, 128
    %1139 = vxpose.xlu0.b32.cont [5/16] 0.0, 128
    %1140 = vxpose.xlu0.b32.cont [6/16] 0.0, 128
    %1141 = vxpose.xlu0.b32.cont [7/16] 0.0, 128
    %1142 = vxpose.xlu0.b32.cont [8/16] 0.0, 128
    %1143 = vxpose.xlu0.b32.cont [9/16] 0.0, 128
    %1144 = vxpose.xlu0.b32.cont [10/16] 0.0, 128
    %1145 = vxpose.xlu0.b32.cont [11/16] 0.0, 128
    %1146 = vxpose.xlu0.b32.cont [12/16] 0.0, 128
    %1147 = vxpose.xlu0.b32.cont [13/16] 0.0, 128
    %1148 = vxpose.xlu0.b32.cont [14/16] 0.0, 128
    %1149 = vxpose.xlu0.b32.cont [15/16] 0.0, 128
    %1150 = vxpose.xlu0.b32.end [16/16] 0.0, 128
    %v1151 = vpop.trf.xlu0
    %v1152 = vpop.trf.xlu0
    %v1153 = vpop.trf.xlu0
    %v1154 = vpop.trf.xlu0
    %v1155 = vpop.trf.xlu0
    %v1156 = vpop.trf.xlu0
    %v1157 = vpop.trf.xlu0
    %v1158 = vpop.trf.xlu0
    %v1159 = vpop.trf.xlu0
    %v1160 = vpop.trf.xlu0
    %v1161 = vpop.trf.xlu0
    %v1162 = vpop.trf.xlu0
    %v1163 = vpop.trf.xlu0
    %v1164 = vpop.trf.xlu0
    %v1165 = vpop.trf.xlu0
    %v1166 = vpop.trf.xlu0
    %1167 = vxpose.xlu0.b32.start [1/16] %v1128, 128
    %1168 = vxpose.xlu0.b32.cont [2/16] 0.0, 128
    %1169 = vxpose.xlu0.b32.cont [3/16] 0.0, 128
    %1170 = vxpose.xlu0.b32.cont [4/16] 0.0, 128
    %1171 = vxpose.xlu0.b32.cont [5/16] 0.0, 128
    %1172 = vxpose.xlu0.b32.cont [6/16] 0.0, 128
    %1173 = vxpose.xlu0.b32.cont [7/16] 0.0, 128
    %1174 = vxpose.xlu0.b32.cont [8/16] 0.0, 128
    %1175 = vxpose.xlu0.b32.cont [9/16] 0.0, 128
    %1176 = vxpose.xlu0.b32.cont [10/16] 0.0, 128
    %1177 = vxpose.xlu0.b32.cont [11/16] 0.0, 128
    %1178 = vxpose.xlu0.b32.cont [12/16] 0.0, 128
    %1179 = vxpose.xlu0.b32.cont [13/16] 0.0, 128
    %1180 = vxpose.xlu0.b32.cont [14/16] 0.0, 128
    %1181 = vxpose.xlu0.b32.cont [15/16] 0.0, 128
    %1182 = vxpose.xlu0.b32.end [16/16] 0.0, 128
    %v1183 = vpop.trf.xlu0
    %v1184 = vpop.trf.xlu0
    %v1185 = vpop.trf.xlu0
    %v1186 = vpop.trf.xlu0
    %v1187 = vpop.trf.xlu0
    %v1188 = vpop.trf.xlu0
    %v1189 = vpop.trf.xlu0
    %v1190 = vpop.trf.xlu0
    %v1191 = vpop.trf.xlu0
    %v1192 = vpop.trf.xlu0
    %v1193 = vpop.trf.xlu0
    %v1194 = vpop.trf.xlu0
    %v1195 = vpop.trf.xlu0
    %v1196 = vpop.trf.xlu0
    %v1197 = vpop.trf.xlu0
    %v1198 = vpop.trf.xlu0
    %1199 = vxpose.xlu0.b32.start [1/16] %v1129, 128
    %1200 = vxpose.xlu0.b32.cont [2/16] 0.0, 128
    %1201 = vxpose.xlu0.b32.cont [3/16] 0.0, 128
    %1202 = vxpose.xlu0.b32.cont [4/16] 0.0, 128
    %1203 = vxpose.xlu0.b32.cont [5/16] 0.0, 128
    %1204 = vxpose.xlu0.b32.cont [6/16] 0.0, 128
    %1205 = vxpose.xlu0.b32.cont [7/16] 0.0, 128
    %1206 = vxpose.xlu0.b32.cont [8/16] 0.0, 128
    %1207 = vxpose.xlu0.b32.cont [9/16] 0.0, 128
    %1208 = vxpose.xlu0.b32.cont [10/16] 0.0, 128
    %1209 = vxpose.xlu0.b32.cont [11/16] 0.0, 128
    %1210 = vxpose.xlu0.b32.cont [12/16] 0.0, 128
    %1211 = vxpose.xlu0.b32.cont [13/16] 0.0, 128
    %1212 = vxpose.xlu0.b32.cont [14/16] 0.0, 128
    %1213 = vxpose.xlu0.b32.cont [15/16] 0.0, 128
    %1214 = vxpose.xlu0.b32.end [16/16] 0.0, 128
    %v1215 = vpop.trf.xlu0
    %v1216 = vpop.trf.xlu0
    %v1217 = vpop.trf.xlu0
    %v1218 = vpop.trf.xlu0
    %v1219 = vpop.trf.xlu0
    %v1220 = vpop.trf.xlu0
    %v1221 = vpop.trf.xlu0
    %v1222 = vpop.trf.xlu0
    %v1223 = vpop.trf.xlu0
    %v1224 = vpop.trf.xlu0
    %v1225 = vpop.trf.xlu0
    %v1226 = vpop.trf.xlu0
    %v1227 = vpop.trf.xlu0
    %v1228 = vpop.trf.xlu0
    %v1229 = vpop.trf.xlu0
    %v1230 = vpop.trf.xlu0
    %1231 = vxpose.xlu0.b32.start [1/16] %v1130, 128
    %1232 = vxpose.xlu0.b32.cont [2/16] 0.0, 128
    %1233 = vxpose.xlu0.b32.cont [3/16] 0.0, 128
    %1234 = vxpose.xlu0.b32.cont [4/16] 0.0, 128
    %1235 = vxpose.xlu0.b32.cont [5/16] 0.0, 128
    %1236 = vxpose.xlu0.b32.cont [6/16] 0.0, 128
    %1237 = vxpose.xlu0.b32.cont [7/16] 0.0, 128
    %1238 = vxpose.xlu0.b32.cont [8/16] 0.0, 128
    %1239 = vxpose.xlu0.b32.cont [9/16] 0.0, 128
    %1240 = vxpose.xlu0.b32.cont [10/16] 0.0, 128
    %1241 = vxpose.xlu0.b32.cont [11/16] 0.0, 128
    %1242 = vxpose.xlu0.b32.cont [12/16] 0.0, 128
    %1243 = vxpose.xlu0.b32.cont [13/16] 0.0, 128
    %1244 = vxpose.xlu0.b32.cont [14/16] 0.0, 128
    %1245 = vxpose.xlu0.b32.cont [15/16] 0.0, 128
    %1246 = vxpose.xlu0.b32.end [16/16] 0.0, 128
    %v1247 = vpop.trf.xlu0
    %v1248 = vpop.trf.xlu0
    %v1249 = vpop.trf.xlu0
    %v1250 = vpop.trf.xlu0
    %v1251 = vpop.trf.xlu0
    %v1252 = vpop.trf.xlu0
    %v1253 = vpop.trf.xlu0
    %v1254 = vpop.trf.xlu0
    %v1255 = vpop.trf.xlu0
    %v1256 = vpop.trf.xlu0
    %v1257 = vpop.trf.xlu0
    %v1258 = vpop.trf.xlu0
    %v1259 = vpop.trf.xlu0
    %v1260 = vpop.trf.xlu0
    %v1261 = vpop.trf.xlu0
    %v1262 = vpop.trf.xlu0
    %1263 = vxpose.xlu0.b32.start [1/16] %v1131, 128
    %1264 = vxpose.xlu0.b32.cont [2/16] 0.0, 128
    %1265 = vxpose.xlu0.b32.cont [3/16] 0.0, 128
    %1266 = vxpose.xlu0.b32.cont [4/16] 0.0, 128
    %1267 = vxpose.xlu0.b32.cont [5/16] 0.0, 128
    %1268 = vxpose.xlu0.b32.cont [6/16] 0.0, 128
    %1269 = vxpose.xlu0.b32.cont [7/16] 0.0, 128
    %1270 = vxpose.xlu0.b32.cont [8/16] 0.0, 128
    %1271 = vxpose.xlu0.b32.cont [9/16] 0.0, 128
    %1272 = vxpose.xlu0.b32.cont [10/16] 0.0, 128
    %1273 = vxpose.xlu0.b32.cont [11/16] 0.0, 128
    %1274 = vxpose.xlu0.b32.cont [12/16] 0.0, 128
    %1275 = vxpose.xlu0.b32.cont [13/16] 0.0, 128
    %1276 = vxpose.xlu0.b32.cont [14/16] 0.0, 128
    %1277 = vxpose.xlu0.b32.cont [15/16] 0.0, 128
    %1278 = vxpose.xlu0.b32.end [16/16] 0.0, 128
    %v1279 = vpop.trf.xlu0
    %v1280 = vpop.trf.xlu0
    %v1281 = vpop.trf.xlu0
    %v1282 = vpop.trf.xlu0
    %v1283 = vpop.trf.xlu0
    %v1284 = vpop.trf.xlu0
    %v1285 = vpop.trf.xlu0
    %v1286 = vpop.trf.xlu0
    %v1287 = vpop.trf.xlu0
    %v1288 = vpop.trf.xlu0
    %v1289 = vpop.trf.xlu0
    %v1290 = vpop.trf.xlu0
    %v1291 = vpop.trf.xlu0
    %v1292 = vpop.trf.xlu0
    %v1293 = vpop.trf.xlu0
    %v1294 = vpop.trf.xlu0
    %1295 = vxpose.xlu0.b32.start [1/16] %v1132, 128
    %1296 = vxpose.xlu0.b32.cont [2/16] 0.0, 128
    %1297 = vxpose.xlu0.b32.cont [3/16] 0.0, 128
    %1298 = vxpose.xlu0.b32.cont [4/16] 0.0, 128
    %1299 = vxpose.xlu0.b32.cont [5/16] 0.0, 128
    %1300 = vxpose.xlu0.b32.cont [6/16] 0.0, 128
    %1301 = vxpose.xlu0.b32.cont [7/16] 0.0, 128
    %1302 = vxpose.xlu0.b32.cont [8/16] 0.0, 128
    %1303 = vxpose.xlu0.b32.cont [9/16] 0.0, 128
    %1304 = vxpose.xlu0.b32.cont [10/16] 0.0, 128
    %1305 = vxpose.xlu0.b32.cont [11/16] 0.0, 128
    %1306 = vxpose.xlu0.b32.cont [12/16] 0.0, 128
    %1307 = vxpose.xlu0.b32.cont [13/16] 0.0, 128
    %1308 = vxpose.xlu0.b32.cont [14/16] 0.0, 128
    %1309 = vxpose.xlu0.b32.cont [15/16] 0.0, 128
    %1310 = vxpose.xlu0.b32.end [16/16] 0.0, 128
    %v1311 = vpop.trf.xlu0
    %v1312 = vpop.trf.xlu0
    %v1313 = vpop.trf.xlu0
    %v1314 = vpop.trf.xlu0
    %v1315 = vpop.trf.xlu0
    %v1316 = vpop.trf.xlu0
    %v1317 = vpop.trf.xlu0
    %v1318 = vpop.trf.xlu0
    %v1319 = vpop.trf.xlu0
    %v1320 = vpop.trf.xlu0
    %v1321 = vpop.trf.xlu0
    %v1322 = vpop.trf.xlu0
    %v1323 = vpop.trf.xlu0
    %v1324 = vpop.trf.xlu0
    %v1325 = vpop.trf.xlu0
    %v1326 = vpop.trf.xlu0
    %1327 = vxpose.xlu0.b32.start [1/16] %v1133, 128
    %1328 = vxpose.xlu0.b32.cont [2/16] 0.0, 128
    %1329 = vxpose.xlu0.b32.cont [3/16] 0.0, 128
    %1330 = vxpose.xlu0.b32.cont [4/16] 0.0, 128
    %1331 = vxpose.xlu0.b32.cont [5/16] 0.0, 128
    %1332 = vxpose.xlu0.b32.cont [6/16] 0.0, 128
    %1333 = vxpose.xlu0.b32.cont [7/16] 0.0, 128
    %1334 = vxpose.xlu0.b32.cont [8/16] 0.0, 128
    %1335 = vxpose.xlu0.b32.cont [9/16] 0.0, 128
    %1336 = vxpose.xlu0.b32.cont [10/16] 0.0, 128
    %1337 = vxpose.xlu0.b32.cont [11/16] 0.0, 128
    %1338 = vxpose.xlu0.b32.cont [12/16] 0.0, 128
    %1339 = vxpose.xlu0.b32.cont [13/16] 0.0, 128
    %1340 = vxpose.xlu0.b32.cont [14/16] 0.0, 128
    %1341 = vxpose.xlu0.b32.cont [15/16] 0.0, 128
    %1342 = vxpose.xlu0.b32.end [16/16] 0.0, 128
    %v1343 = vpop.trf.xlu0
    %v1344 = vpop.trf.xlu0
    %v1345 = vpop.trf.xlu0
    %v1346 = vpop.trf.xlu0
    %v1347 = vpop.trf.xlu0
    %v1348 = vpop.trf.xlu0
    %v1349 = vpop.trf.xlu0
    %v1350 = vpop.trf.xlu0
    %v1351 = vpop.trf.xlu0
    %v1352 = vpop.trf.xlu0
    %v1353 = vpop.trf.xlu0
    %v1354 = vpop.trf.xlu0
    %v1355 = vpop.trf.xlu0
    %v1356 = vpop.trf.xlu0
    %v1357 = vpop.trf.xlu0
    %v1358 = vpop.trf.xlu0
    %1359 = vxpose.xlu0.b32.start [1/16] %v1134, 128
    %1360 = vxpose.xlu0.b32.cont [2/16] 0.0, 128
    %1361 = vxpose.xlu0.b32.cont [3/16] 0.0, 128
    %1362 = vxpose.xlu0.b32.cont [4/16] 0.0, 128
    %1363 = vxpose.xlu0.b32.cont [5/16] 0.0, 128
    %1364 = vxpose.xlu0.b32.cont [6/16] 0.0, 128
    %1365 = vxpose.xlu0.b32.cont [7/16] 0.0, 128
    %1366 = vxpose.xlu0.b32.cont [8/16] 0.0, 128
    %1367 = vxpose.xlu0.b32.cont [9/16] 0.0, 128
    %1368 = vxpose.xlu0.b32.cont [10/16] 0.0, 128
    %1369 = vxpose.xlu0.b32.cont [11/16] 0.0, 128
    %1370 = vxpose.xlu0.b32.cont [12/16] 0.0, 128
    %1371 = vxpose.xlu0.b32.cont [13/16] 0.0, 128
    %1372 = vxpose.xlu0.b32.cont [14/16] 0.0, 128
    %1373 = vxpose.xlu0.b32.cont [15/16] 0.0, 128
    %1374 = vxpose.xlu0.b32.end [16/16] 0.0, 128
    %v1375 = vpop.trf.xlu0
    %v1376 = vpop.trf.xlu0
    %v1377 = vpop.trf.xlu0
    %v1378 = vpop.trf.xlu0
    %v1379 = vpop.trf.xlu0
    %v1380 = vpop.trf.xlu0
    %v1381 = vpop.trf.xlu0
    %v1382 = vpop.trf.xlu0
    %v1383 = vpop.trf.xlu0
    %v1384 = vpop.trf.xlu0
    %v1385 = vpop.trf.xlu0
    %v1386 = vpop.trf.xlu0
    %v1387 = vpop.trf.xlu0
    %v1388 = vpop.trf.xlu0
    %v1389 = vpop.trf.xlu0
    %v1390 = vpop.trf.xlu0
    %v1391 = vadd.f32 %v1127, %v1151
    %v1392 = vadd.f32 %v1128, %v1183
    %v1393 = vadd.f32 %v1129, %v1215
    %v1394 = vadd.f32 %v1130, %v1247
    %v1395 = vadd.f32 %v1131, %v1279
    %v1396 = vadd.f32 %v1132, %v1311
    %v1397 = vadd.f32 %v1133, %v1343
    %v1398 = vadd.f32 %v1134, %v1375
    %v1399 = vmul.f32 %v1391, %v79
    %v1400 = vmul.f32 %v1392, %v80
    %v1401 = vmul.f32 %v1393, %v81
    %v1402 = vmul.f32 %v1394, %v82
    %v1403 = vmul.f32 %v1395, %v83
    %v1404 = vmul.f32 %v1396, %v84
    %v1405 = vmul.f32 %v1397, %v85
    %v1406 = vmul.f32 %v1398, %v86
    %v1407 = vsel %vm561, %v1399, 0.0
    %v1408 = vrot.slane %v1407, 4
    %v1409 = vadd.f32 %v1407, %v1408
    %v1410 = vrot.slane %v1409, 2
    %v1411 = vadd.f32 %v1409, %v1410
    %v1412 = vrot.slane %v1411, 1
    %v1413 = vadd.f32 %v1411, %v1412
    %v1414 = vsel %vm561, %v1400, 0.0
    %v1415 = vrot.slane %v1414, 4
    %v1416 = vadd.f32 %v1414, %v1415
    %v1417 = vrot.slane %v1416, 2
    %v1418 = vadd.f32 %v1416, %v1417
    %v1419 = vrot.slane %v1418, 1
    %v1420 = vadd.f32 %v1418, %v1419
    %v1421 = vsel %vm561, %v1401, 0.0
    %v1422 = vrot.slane %v1421, 4
    %v1423 = vadd.f32 %v1421, %v1422
    %v1424 = vrot.slane %v1423, 2
    %v1425 = vadd.f32 %v1423, %v1424
    %v1426 = vrot.slane %v1425, 1
    %v1427 = vadd.f32 %v1425, %v1426
    %v1428 = vsel %vm561, %v1402, 0.0
    %v1429 = vrot.slane %v1428, 4
    %v1430 = vadd.f32 %v1428, %v1429
    %v1431 = vrot.slane %v1430, 2
    %v1432 = vadd.f32 %v1430, %v1431
    %v1433 = vrot.slane %v1432, 1
    %v1434 = vadd.f32 %v1432, %v1433
    %v1435 = vsel %vm561, %v1403, 0.0
    %v1436 = vrot.slane %v1435, 4
    %v1437 = vadd.f32 %v1435, %v1436
    %v1438 = vrot.slane %v1437, 2
    %v1439 = vadd.f32 %v1437, %v1438
    %v1440 = vrot.slane %v1439, 1
    %v1441 = vadd.f32 %v1439, %v1440
    %v1442 = vsel %vm561, %v1404, 0.0
    %v1443 = vrot.slane %v1442, 4
    %v1444 = vadd.f32 %v1442, %v1443
    %v1445 = vrot.slane %v1444, 2
    %v1446 = vadd.f32 %v1444, %v1445
    %v1447 = vrot.slane %v1446, 1
    %v1448 = vadd.f32 %v1446, %v1447
    %v1449 = vsel %vm561, %v1405, 0.0
    %v1450 = vrot.slane %v1449, 4
    %v1451 = vadd.f32 %v1449, %v1450
    %v1452 = vrot.slane %v1451, 2
    %v1453 = vadd.f32 %v1451, %v1452
    %v1454 = vrot.slane %v1453, 1
    %v1455 = vadd.f32 %v1453, %v1454
    %v1456 = vsel %vm561, %v1406, 0.0
    %v1457 = vrot.slane %v1456, 4
    %v1458 = vadd.f32 %v1456, %v1457
    %v1459 = vrot.slane %v1458, 2
    %v1460 = vadd.f32 %v1458, %v1459
    %v1461 = vrot.slane %v1460, 1
    %v1462 = vadd.f32 %v1460, %v1461
    %v1463 = vsub.f32 %v1413, 1.0
    %v1464 = vsub.f32 %v1420, 1.0
    %v1465 = vsub.f32 %v1427, 1.0
    %v1466 = vsub.f32 %v1434, 1.0
    %v1467 = vsub.f32 %v1441, 1.0
    %v1468 = vsub.f32 %v1448, 1.0
    %v1469 = vsub.f32 %v1455, 1.0
    %v1470 = vsub.f32 %v1462, 1.0
    %v1471 = vmax.f32 %v1463, 0.0
    %v1472 = vmax.f32 %v1464, 0.0
    %v1473 = vmax.f32 %v1465, 0.0
    %v1474 = vmax.f32 %v1466, 0.0
    %v1475 = vmax.f32 %v1467, 0.0
    %v1476 = vmax.f32 %v1468, 0.0
    %v1477 = vmax.f32 %v1469, 0.0
    %v1478 = vmax.f32 %v1470, 0.0
    %v1479 = vstv %s917
    %v1480 = vmul.f32 %v1479, %v1471
    %v1481 = vmul.f32 %v1479, %v1472
    %v1482 = vmul.f32 %v1479, %v1473
    %v1483 = vmul.f32 %v1479, %v1474
    %v1484 = vmul.f32 %v1479, %v1475
    %v1485 = vmul.f32 %v1479, %v1476
    %v1486 = vmul.f32 %v1479, %v1477
    %v1487 = vmul.f32 %v1479, %v1478
    %v1488 = vadd.f32 %v635, %v1480
    %v1489 = vadd.f32 %v636, %v1481
    %v1490 = vadd.f32 %v637, %v1482
    %v1491 = vadd.f32 %v638, %v1483
    %v1492 = vadd.f32 %v639, %v1484
    %v1493 = vadd.f32 %v640, %v1485
    %v1494 = vadd.f32 %v641, %v1486
    %v1495 = vadd.f32 %v642, %v1487
    %v1496 = vmul.f32 %v1463, %v927
    %v1497 = vmul.f32 %v1464, %v927
    %v1498 = vmul.f32 %v1465, %v927
    %v1499 = vmul.f32 %v1466, %v927
    %v1500 = vmul.f32 %v1467, %v927
    %v1501 = vmul.f32 %v1468, %v927
    %v1502 = vmul.f32 %v1469, %v927
    %v1503 = vmul.f32 %v1470, %v927
    %v1504 = vxor.u32 %v1496, 2147483648
    %v1505 = vxor.u32 %v1497, 2147483648
    %v1506 = vxor.u32 %v1498, 2147483648
    %v1507 = vxor.u32 %v1499, 2147483648
    %v1508 = vxor.u32 %v1500, 2147483648
    %v1509 = vxor.u32 %v1501, 2147483648
    %v1510 = vxor.u32 %v1502, 2147483648
    %v1511 = vxor.u32 %v1503, 2147483648
    %v1512 = vmul.f32 %v1504, 1.442695
    %v1513 = vpow.pop %v1512
    %v1514 = vmul.f32 %v1505, 1.442695
    %v1515 = vpow.pop %v1514
    %v1516 = vmul.f32 %v1506, 1.442695
    %v1517 = vpow.pop %v1516
    %v1518 = vmul.f32 %v1507, 1.442695
    %v1519 = vpow.pop %v1518
    %v1520 = vmul.f32 %v1508, 1.442695
    %v1521 = vpow.pop %v1520
    %v1522 = vmul.f32 %v1509, 1.442695
    %v1523 = vpow.pop %v1522
    %v1524 = vmul.f32 %v1510, 1.442695
    %v1525 = vpow.pop %v1524
    %v1526 = vmul.f32 %v1511, 1.442695
    %v1527 = vpow.pop %v1526
    %v1528 = vadd.f32 %v1513, 1.0
    %v1529 = vadd.f32 %v1515, 1.0
    %v1530 = vadd.f32 %v1517, 1.0
    %v1531 = vadd.f32 %v1519, 1.0
    %v1532 = vadd.f32 %v1521, 1.0
    %v1533 = vadd.f32 %v1523, 1.0
    %v1534 = vadd.f32 %v1525, 1.0
    %v1535 = vadd.f32 %v1527, 1.0
    %v1536 = vrcp.pop %v1528
    %v1537 = vmul.f32 1.0, %v1536
    %v1538 = vrcp.pop %v1529
    %v1539 = vmul.f32 1.0, %v1538
    %v1540 = vrcp.pop %v1530
    %v1541 = vmul.f32 1.0, %v1540
    %v1542 = vrcp.pop %v1531
    %v1543 = vmul.f32 1.0, %v1542
    %v1544 = vrcp.pop %v1532
    %v1545 = vmul.f32 1.0, %v1544
    %v1546 = vrcp.pop %v1533
    %v1547 = vmul.f32 1.0, %v1546
    %v1548 = vrcp.pop %v1534
    %v1549 = vmul.f32 1.0, %v1548
    %v1550 = vrcp.pop %v1535
    %v1551 = vmul.f32 1.0, %v1550
    %v1552 = vmul.f32 %v1488, %v1537
    %v1553 = vmul.f32 %v1489, %v1539
    %v1554 = vmul.f32 %v1490, %v1541
    %v1555 = vmul.f32 %v1491, %v1543
    %v1556 = vmul.f32 %v1492, %v1545
    %v1557 = vmul.f32 %v1493, %v1547
    %v1558 = vmul.f32 %v1494, %v1549
    %v1559 = vmul.f32 %v1495, %v1551
    %v1568 = vsel %vm1000, %v1553, %v1552
    %v1569 = vsel %vm1002, %v1554, %v1568
    %v1570 = vsel %vm1004, %v1555, %v1569
    %v1571 = vsel %vm1006, %v1556, %v1570
    %v1572 = vsel %vm1008, %v1557, %v1571
    %v1573 = vsel %vm1010, %v1558, %v1572
    %v1574 = vsel %vm1012, %v1559, %v1573
    %v1576 = vsel %vm561, %v1574, 0.0
    %1577 = vadd.xlane.f32.xlu0 %v1576
    %v1578 = vpop.xlane.xlu0 %1577
    %1579 = vxpose.xlu0.b32.start [1/16] %v1578, 128
    %1580 = vxpose.xlu0.b32.cont [2/16] 0.0, 128
    %1581 = vxpose.xlu0.b32.cont [3/16] 0.0, 128
    %1582 = vxpose.xlu0.b32.cont [4/16] 0.0, 128
    %1583 = vxpose.xlu0.b32.cont [5/16] 0.0, 128
    %1584 = vxpose.xlu0.b32.cont [6/16] 0.0, 128
    %1585 = vxpose.xlu0.b32.cont [7/16] 0.0, 128
    %1586 = vxpose.xlu0.b32.cont [8/16] 0.0, 128
    %1587 = vxpose.xlu0.b32.cont [9/16] 0.0, 128
    %1588 = vxpose.xlu0.b32.cont [10/16] 0.0, 128
    %1589 = vxpose.xlu0.b32.cont [11/16] 0.0, 128
    %1590 = vxpose.xlu0.b32.cont [12/16] 0.0, 128
    %1591 = vxpose.xlu0.b32.cont [13/16] 0.0, 128
    %1592 = vxpose.xlu0.b32.cont [14/16] 0.0, 128
    %1593 = vxpose.xlu0.b32.cont [15/16] 0.0, 128
    %1594 = vxpose.xlu0.b32.end [16/16] 0.0, 128
    %v1595 = vpop.trf.xlu0
    %v1596 = vpop.trf.xlu0
    %v1597 = vpop.trf.xlu0
    %v1598 = vpop.trf.xlu0
    %v1599 = vpop.trf.xlu0
    %v1600 = vpop.trf.xlu0
    %v1601 = vpop.trf.xlu0
    %v1602 = vpop.trf.xlu0
    %v1603 = vpop.trf.xlu0
    %v1604 = vpop.trf.xlu0
    %v1605 = vpop.trf.xlu0
    %v1606 = vpop.trf.xlu0
    %v1607 = vpop.trf.xlu0
    %v1608 = vpop.trf.xlu0
    %v1609 = vpop.trf.xlu0
    %v1610 = vpop.trf.xlu0
    %v1611 = vsub.f32 %v907, %v1578
    %v1612 = vsub.f32 %v908, %v1578
    %v1613 = vsub.f32 %v909, %v1578
    %v1614 = vsub.f32 %v910, %v1578
    %v1615 = vsub.f32 %v911, %v1578
    %v1616 = vsub.f32 %v912, %v1578
    %v1617 = vsub.f32 %v913, %v1578
    %v1618 = vsub.f32 %v914, %v1578
    %v1619 = vlaneseq
    %v1620 = vshrl.u32 %v1619, 7
    %v1621 = vsub.s32 0, %v1620
    %v1622 = vrot.slane %v1595, %v1621
    %v1623 = vsub.f32 %v1611, %v1622
    %v1624 = vsub.f32 %v1612, %v1622
    %v1625 = vsub.f32 %v1613, %v1622
    %v1626 = vsub.f32 %v1614, %v1622
    %v1627 = vsub.f32 %v1615, %v1622
    %v1628 = vsub.f32 %v1616, %v1622
    %v1629 = vsub.f32 %v1617, %v1622
    %v1630 = vsub.f32 %v1618, %v1622
    %v1631 = vmul.f32 %v1119, %v919
    %v1632 = vmul.f32 %v1120, %v920
    %v1633 = vmul.f32 %v1121, %v921
    %v1634 = vmul.f32 %v1122, %v922
    %v1635 = vmul.f32 %v1123, %v923
    %v1636 = vmul.f32 %v1124, %v924
    %v1637 = vmul.f32 %v1125, %v925
    %v1638 = vmul.f32 %v1126, %v926
    %v1639 = vmul.f32 %v1631, %v1623
    %v1640 = vmul.f32 %v1632, %v1624
    %v1641 = vmul.f32 %v1633, %v1625
    %v1642 = vmul.f32 %v1634, %v1626
    %v1643 = vmul.f32 %v1635, %v1627
    %v1644 = vmul.f32 %v1636, %v1628
    %v1645 = vmul.f32 %v1637, %v1629
    %v1646 = vmul.f32 %v1638, %v1630
    %v1647 = vadd.f32 %v1119, %v1639
    %v1648 = vadd.f32 %v1120, %v1640
    %v1649 = vadd.f32 %v1121, %v1641
    %v1650 = vadd.f32 %v1122, %v1642
    %v1651 = vadd.f32 %v1123, %v1643
    %v1652 = vadd.f32 %v1124, %v1644
    %v1653 = vadd.f32 %v1125, %v1645
    %v1654 = vadd.f32 %v1126, %v1646
    %v1655 = vand.u32 2147483647, %v1647
    %v1656 = vand.u32 2147483647, %v1648
    %v1657 = vand.u32 2147483647, %v1649
    %v1658 = vand.u32 2147483647, %v1650
    %v1659 = vand.u32 2147483647, %v1651
    %v1660 = vand.u32 2147483647, %v1652
    %v1661 = vand.u32 2147483647, %v1653
    %v1662 = vand.u32 2147483647, %v1654
    %v1663 = vsub.f32 %v1655, %v1102
    %v1664 = vsub.f32 %v1656, %v1102
    %v1665 = vsub.f32 %v1657, %v1102
    %v1666 = vsub.f32 %v1658, %v1102
    %v1667 = vsub.f32 %v1659, %v1102
    %v1668 = vsub.f32 %v1660, %v1102
    %v1669 = vsub.f32 %v1661, %v1102
    %v1670 = vsub.f32 %v1662, %v1102
    %v1671 = vmax.f32 %v1663, 0.0
    %v1672 = vmax.f32 %v1664, 0.0
    %v1673 = vmax.f32 %v1665, 0.0
    %v1674 = vmax.f32 %v1666, 0.0
    %v1675 = vmax.f32 %v1667, 0.0
    %v1676 = vmax.f32 %v1668, 0.0
    %v1677 = vmax.f32 %v1669, 0.0
    %v1678 = vmax.f32 %v1670, 0.0
    %v1679 = vmin.f32 %v1671, 1.0
    %v1680 = vmin.f32 %v1672, 1.0
    %v1681 = vmin.f32 %v1673, 1.0
    %v1682 = vmin.f32 %v1674, 1.0
    %v1683 = vmin.f32 %v1675, 1.0
    %v1684 = vmin.f32 %v1676, 1.0
    %v1685 = vmin.f32 %v1677, 1.0
    %v1686 = vmin.f32 %v1678, 1.0
    %v1687 = vmul.f32 %v1679, %v1679
    %v1688 = vmul.f32 %v1680, %v1680
    %v1689 = vmul.f32 %v1681, %v1681
    %v1690 = vmul.f32 %v1682, %v1682
    %v1691 = vmul.f32 %v1683, %v1683
    %v1692 = vmul.f32 %v1684, %v1684
    %v1693 = vmul.f32 %v1685, %v1685
    %v1694 = vmul.f32 %v1686, %v1686
    %1695 = vxpose.xlu0.b32.start [1/16] %v1687, 128
    %1696 = vxpose.xlu0.b32.cont [2/16] 0.0, 128
    %1697 = vxpose.xlu0.b32.cont [3/16] 0.0, 128
    %1698 = vxpose.xlu0.b32.cont [4/16] 0.0, 128
    %1699 = vxpose.xlu0.b32.cont [5/16] 0.0, 128
    %1700 = vxpose.xlu0.b32.cont [6/16] 0.0, 128
    %1701 = vxpose.xlu0.b32.cont [7/16] 0.0, 128
    %1702 = vxpose.xlu0.b32.cont [8/16] 0.0, 128
    %1703 = vxpose.xlu0.b32.cont [9/16] 0.0, 128
    %1704 = vxpose.xlu0.b32.cont [10/16] 0.0, 128
    %1705 = vxpose.xlu0.b32.cont [11/16] 0.0, 128
    %1706 = vxpose.xlu0.b32.cont [12/16] 0.0, 128
    %1707 = vxpose.xlu0.b32.cont [13/16] 0.0, 128
    %1708 = vxpose.xlu0.b32.cont [14/16] 0.0, 128
    %1709 = vxpose.xlu0.b32.cont [15/16] 0.0, 128
    %1710 = vxpose.xlu0.b32.end [16/16] 0.0, 128
    %v1711 = vpop.trf.xlu0
    %v1712 = vpop.trf.xlu0
    %v1713 = vpop.trf.xlu0
    %v1714 = vpop.trf.xlu0
    %v1715 = vpop.trf.xlu0
    %v1716 = vpop.trf.xlu0
    %v1717 = vpop.trf.xlu0
    %v1718 = vpop.trf.xlu0
    %v1719 = vpop.trf.xlu0
    %v1720 = vpop.trf.xlu0
    %v1721 = vpop.trf.xlu0
    %v1722 = vpop.trf.xlu0
    %v1723 = vpop.trf.xlu0
    %v1724 = vpop.trf.xlu0
    %v1725 = vpop.trf.xlu0
    %v1726 = vpop.trf.xlu0
    %1727 = vxpose.xlu0.b32.start [1/16] %v1688, 128
    %1728 = vxpose.xlu0.b32.cont [2/16] 0.0, 128
    %1729 = vxpose.xlu0.b32.cont [3/16] 0.0, 128
    %1730 = vxpose.xlu0.b32.cont [4/16] 0.0, 128
    %1731 = vxpose.xlu0.b32.cont [5/16] 0.0, 128
    %1732 = vxpose.xlu0.b32.cont [6/16] 0.0, 128
    %1733 = vxpose.xlu0.b32.cont [7/16] 0.0, 128
    %1734 = vxpose.xlu0.b32.cont [8/16] 0.0, 128
    %1735 = vxpose.xlu0.b32.cont [9/16] 0.0, 128
    %1736 = vxpose.xlu0.b32.cont [10/16] 0.0, 128
    %1737 = vxpose.xlu0.b32.cont [11/16] 0.0, 128
    %1738 = vxpose.xlu0.b32.cont [12/16] 0.0, 128
    %1739 = vxpose.xlu0.b32.cont [13/16] 0.0, 128
    %1740 = vxpose.xlu0.b32.cont [14/16] 0.0, 128
    %1741 = vxpose.xlu0.b32.cont [15/16] 0.0, 128
    %1742 = vxpose.xlu0.b32.end [16/16] 0.0, 128
    %v1743 = vpop.trf.xlu0
    %v1744 = vpop.trf.xlu0
    %v1745 = vpop.trf.xlu0
    %v1746 = vpop.trf.xlu0
    %v1747 = vpop.trf.xlu0
    %v1748 = vpop.trf.xlu0
    %v1749 = vpop.trf.xlu0
    %v1750 = vpop.trf.xlu0
    %v1751 = vpop.trf.xlu0
    %v1752 = vpop.trf.xlu0
    %v1753 = vpop.trf.xlu0
    %v1754 = vpop.trf.xlu0
    %v1755 = vpop.trf.xlu0
    %v1756 = vpop.trf.xlu0
    %v1757 = vpop.trf.xlu0
    %v1758 = vpop.trf.xlu0
    %1759 = vxpose.xlu0.b32.start [1/16] %v1689, 128
    %1760 = vxpose.xlu0.b32.cont [2/16] 0.0, 128
    %1761 = vxpose.xlu0.b32.cont [3/16] 0.0, 128
    %1762 = vxpose.xlu0.b32.cont [4/16] 0.0, 128
    %1763 = vxpose.xlu0.b32.cont [5/16] 0.0, 128
    %1764 = vxpose.xlu0.b32.cont [6/16] 0.0, 128
    %1765 = vxpose.xlu0.b32.cont [7/16] 0.0, 128
    %1766 = vxpose.xlu0.b32.cont [8/16] 0.0, 128
    %1767 = vxpose.xlu0.b32.cont [9/16] 0.0, 128
    %1768 = vxpose.xlu0.b32.cont [10/16] 0.0, 128
    %1769 = vxpose.xlu0.b32.cont [11/16] 0.0, 128
    %1770 = vxpose.xlu0.b32.cont [12/16] 0.0, 128
    %1771 = vxpose.xlu0.b32.cont [13/16] 0.0, 128
    %1772 = vxpose.xlu0.b32.cont [14/16] 0.0, 128
    %1773 = vxpose.xlu0.b32.cont [15/16] 0.0, 128
    %1774 = vxpose.xlu0.b32.end [16/16] 0.0, 128
    %v1775 = vpop.trf.xlu0
    %v1776 = vpop.trf.xlu0
    %v1777 = vpop.trf.xlu0
    %v1778 = vpop.trf.xlu0
    %v1779 = vpop.trf.xlu0
    %v1780 = vpop.trf.xlu0
    %v1781 = vpop.trf.xlu0
    %v1782 = vpop.trf.xlu0
    %v1783 = vpop.trf.xlu0
    %v1784 = vpop.trf.xlu0
    %v1785 = vpop.trf.xlu0
    %v1786 = vpop.trf.xlu0
    %v1787 = vpop.trf.xlu0
    %v1788 = vpop.trf.xlu0
    %v1789 = vpop.trf.xlu0
    %v1790 = vpop.trf.xlu0
    %1791 = vxpose.xlu0.b32.start [1/16] %v1690, 128
    %1792 = vxpose.xlu0.b32.cont [2/16] 0.0, 128
    %1793 = vxpose.xlu0.b32.cont [3/16] 0.0, 128
    %1794 = vxpose.xlu0.b32.cont [4/16] 0.0, 128
    %1795 = vxpose.xlu0.b32.cont [5/16] 0.0, 128
    %1796 = vxpose.xlu0.b32.cont [6/16] 0.0, 128
    %1797 = vxpose.xlu0.b32.cont [7/16] 0.0, 128
    %1798 = vxpose.xlu0.b32.cont [8/16] 0.0, 128
    %1799 = vxpose.xlu0.b32.cont [9/16] 0.0, 128
    %1800 = vxpose.xlu0.b32.cont [10/16] 0.0, 128
    %1801 = vxpose.xlu0.b32.cont [11/16] 0.0, 128
    %1802 = vxpose.xlu0.b32.cont [12/16] 0.0, 128
    %1803 = vxpose.xlu0.b32.cont [13/16] 0.0, 128
    %1804 = vxpose.xlu0.b32.cont [14/16] 0.0, 128
    %1805 = vxpose.xlu0.b32.cont [15/16] 0.0, 128
    %1806 = vxpose.xlu0.b32.end [16/16] 0.0, 128
    %v1807 = vpop.trf.xlu0
    %v1808 = vpop.trf.xlu0
    %v1809 = vpop.trf.xlu0
    %v1810 = vpop.trf.xlu0
    %v1811 = vpop.trf.xlu0
    %v1812 = vpop.trf.xlu0
    %v1813 = vpop.trf.xlu0
    %v1814 = vpop.trf.xlu0
    %v1815 = vpop.trf.xlu0
    %v1816 = vpop.trf.xlu0
    %v1817 = vpop.trf.xlu0
    %v1818 = vpop.trf.xlu0
    %v1819 = vpop.trf.xlu0
    %v1820 = vpop.trf.xlu0
    %v1821 = vpop.trf.xlu0
    %v1822 = vpop.trf.xlu0
    %1823 = vxpose.xlu0.b32.start [1/16] %v1691, 128
    %1824 = vxpose.xlu0.b32.cont [2/16] 0.0, 128
    %1825 = vxpose.xlu0.b32.cont [3/16] 0.0, 128
    %1826 = vxpose.xlu0.b32.cont [4/16] 0.0, 128
    %1827 = vxpose.xlu0.b32.cont [5/16] 0.0, 128
    %1828 = vxpose.xlu0.b32.cont [6/16] 0.0, 128
    %1829 = vxpose.xlu0.b32.cont [7/16] 0.0, 128
    %1830 = vxpose.xlu0.b32.cont [8/16] 0.0, 128
    %1831 = vxpose.xlu0.b32.cont [9/16] 0.0, 128
    %1832 = vxpose.xlu0.b32.cont [10/16] 0.0, 128
    %1833 = vxpose.xlu0.b32.cont [11/16] 0.0, 128
    %1834 = vxpose.xlu0.b32.cont [12/16] 0.0, 128
    %1835 = vxpose.xlu0.b32.cont [13/16] 0.0, 128
    %1836 = vxpose.xlu0.b32.cont [14/16] 0.0, 128
    %1837 = vxpose.xlu0.b32.cont [15/16] 0.0, 128
    %1838 = vxpose.xlu0.b32.end [16/16] 0.0, 128
    %v1839 = vpop.trf.xlu0
    %v1840 = vpop.trf.xlu0
    %v1841 = vpop.trf.xlu0
    %v1842 = vpop.trf.xlu0
    %v1843 = vpop.trf.xlu0
    %v1844 = vpop.trf.xlu0
    %v1845 = vpop.trf.xlu0
    %v1846 = vpop.trf.xlu0
    %v1847 = vpop.trf.xlu0
    %v1848 = vpop.trf.xlu0
    %v1849 = vpop.trf.xlu0
    %v1850 = vpop.trf.xlu0
    %v1851 = vpop.trf.xlu0
    %v1852 = vpop.trf.xlu0
    %v1853 = vpop.trf.xlu0
    %v1854 = vpop.trf.xlu0
    %1855 = vxpose.xlu0.b32.start [1/16] %v1692, 128
    %1856 = vxpose.xlu0.b32.cont [2/16] 0.0, 128
    %1857 = vxpose.xlu0.b32.cont [3/16] 0.0, 128
    %1858 = vxpose.xlu0.b32.cont [4/16] 0.0, 128
    %1859 = vxpose.xlu0.b32.cont [5/16] 0.0, 128
    %1860 = vxpose.xlu0.b32.cont [6/16] 0.0, 128
    %1861 = vxpose.xlu0.b32.cont [7/16] 0.0, 128
    %1862 = vxpose.xlu0.b32.cont [8/16] 0.0, 128
    %1863 = vxpose.xlu0.b32.cont [9/16] 0.0, 128
    %1864 = vxpose.xlu0.b32.cont [10/16] 0.0, 128
    %1865 = vxpose.xlu0.b32.cont [11/16] 0.0, 128
    %1866 = vxpose.xlu0.b32.cont [12/16] 0.0, 128
    %1867 = vxpose.xlu0.b32.cont [13/16] 0.0, 128
    %1868 = vxpose.xlu0.b32.cont [14/16] 0.0, 128
    %1869 = vxpose.xlu0.b32.cont [15/16] 0.0, 128
    %1870 = vxpose.xlu0.b32.end [16/16] 0.0, 128
    %v1871 = vpop.trf.xlu0
    %v1872 = vpop.trf.xlu0
    %v1873 = vpop.trf.xlu0
    %v1874 = vpop.trf.xlu0
    %v1875 = vpop.trf.xlu0
    %v1876 = vpop.trf.xlu0
    %v1877 = vpop.trf.xlu0
    %v1878 = vpop.trf.xlu0
    %v1879 = vpop.trf.xlu0
    %v1880 = vpop.trf.xlu0
    %v1881 = vpop.trf.xlu0
    %v1882 = vpop.trf.xlu0
    %v1883 = vpop.trf.xlu0
    %v1884 = vpop.trf.xlu0
    %v1885 = vpop.trf.xlu0
    %v1886 = vpop.trf.xlu0
    %1887 = vxpose.xlu0.b32.start [1/16] %v1693, 128
    %1888 = vxpose.xlu0.b32.cont [2/16] 0.0, 128
    %1889 = vxpose.xlu0.b32.cont [3/16] 0.0, 128
    %1890 = vxpose.xlu0.b32.cont [4/16] 0.0, 128
    %1891 = vxpose.xlu0.b32.cont [5/16] 0.0, 128
    %1892 = vxpose.xlu0.b32.cont [6/16] 0.0, 128
    %1893 = vxpose.xlu0.b32.cont [7/16] 0.0, 128
    %1894 = vxpose.xlu0.b32.cont [8/16] 0.0, 128
    %1895 = vxpose.xlu0.b32.cont [9/16] 0.0, 128
    %1896 = vxpose.xlu0.b32.cont [10/16] 0.0, 128
    %1897 = vxpose.xlu0.b32.cont [11/16] 0.0, 128
    %1898 = vxpose.xlu0.b32.cont [12/16] 0.0, 128
    %1899 = vxpose.xlu0.b32.cont [13/16] 0.0, 128
    %1900 = vxpose.xlu0.b32.cont [14/16] 0.0, 128
    %1901 = vxpose.xlu0.b32.cont [15/16] 0.0, 128
    %1902 = vxpose.xlu0.b32.end [16/16] 0.0, 128
    %v1903 = vpop.trf.xlu0
    %v1904 = vpop.trf.xlu0
    %v1905 = vpop.trf.xlu0
    %v1906 = vpop.trf.xlu0
    %v1907 = vpop.trf.xlu0
    %v1908 = vpop.trf.xlu0
    %v1909 = vpop.trf.xlu0
    %v1910 = vpop.trf.xlu0
    %v1911 = vpop.trf.xlu0
    %v1912 = vpop.trf.xlu0
    %v1913 = vpop.trf.xlu0
    %v1914 = vpop.trf.xlu0
    %v1915 = vpop.trf.xlu0
    %v1916 = vpop.trf.xlu0
    %v1917 = vpop.trf.xlu0
    %v1918 = vpop.trf.xlu0
    %1919 = vxpose.xlu0.b32.start [1/16] %v1694, 128
    %1920 = vxpose.xlu0.b32.cont [2/16] 0.0, 128
    %1921 = vxpose.xlu0.b32.cont [3/16] 0.0, 128
    %1922 = vxpose.xlu0.b32.cont [4/16] 0.0, 128
    %1923 = vxpose.xlu0.b32.cont [5/16] 0.0, 128
    %1924 = vxpose.xlu0.b32.cont [6/16] 0.0, 128
    %1925 = vxpose.xlu0.b32.cont [7/16] 0.0, 128
    %1926 = vxpose.xlu0.b32.cont [8/16] 0.0, 128
    %1927 = vxpose.xlu0.b32.cont [9/16] 0.0, 128
    %1928 = vxpose.xlu0.b32.cont [10/16] 0.0, 128
    %1929 = vxpose.xlu0.b32.cont [11/16] 0.0, 128
    %1930 = vxpose.xlu0.b32.cont [12/16] 0.0, 128
    %1931 = vxpose.xlu0.b32.cont [13/16] 0.0, 128
    %1932 = vxpose.xlu0.b32.cont [14/16] 0.0, 128
    %1933 = vxpose.xlu0.b32.cont [15/16] 0.0, 128
    %1934 = vxpose.xlu0.b32.end [16/16] 0.0, 128
    %v1935 = vpop.trf.xlu0
    %v1936 = vpop.trf.xlu0
    %v1937 = vpop.trf.xlu0
    %v1938 = vpop.trf.xlu0
    %v1939 = vpop.trf.xlu0
    %v1940 = vpop.trf.xlu0
    %v1941 = vpop.trf.xlu0
    %v1942 = vpop.trf.xlu0
    %v1943 = vpop.trf.xlu0
    %v1944 = vpop.trf.xlu0
    %v1945 = vpop.trf.xlu0
    %v1946 = vpop.trf.xlu0
    %v1947 = vpop.trf.xlu0
    %v1948 = vpop.trf.xlu0
    %v1949 = vpop.trf.xlu0
    %v1950 = vpop.trf.xlu0
    %v1951 = vadd.f32 %v1687, %v1711
    %v1952 = vadd.f32 %v1688, %v1743
    %v1953 = vadd.f32 %v1689, %v1775
    %v1954 = vadd.f32 %v1690, %v1807
    %v1955 = vadd.f32 %v1691, %v1839
    %v1956 = vadd.f32 %v1692, %v1871
    %v1957 = vadd.f32 %v1693, %v1903
    %v1958 = vadd.f32 %v1694, %v1935
    %v1959 = vmul.f32 %v1951, %v79
    %v1960 = vmul.f32 %v1952, %v80
    %v1961 = vmul.f32 %v1953, %v81
    %v1962 = vmul.f32 %v1954, %v82
    %v1963 = vmul.f32 %v1955, %v83
    %v1964 = vmul.f32 %v1956, %v84
    %v1965 = vmul.f32 %v1957, %v85
    %v1966 = vmul.f32 %v1958, %v86
    %v1967 = vsel %vm561, %v1959, 0.0
    %v1968 = vrot.slane %v1967, 4
    %v1969 = vadd.f32 %v1967, %v1968
    %v1970 = vrot.slane %v1969, 2
    %v1971 = vadd.f32 %v1969, %v1970
    %v1972 = vrot.slane %v1971, 1
    %v1973 = vadd.f32 %v1971, %v1972
    %v1974 = vsel %vm561, %v1960, 0.0
    %v1975 = vrot.slane %v1974, 4
    %v1976 = vadd.f32 %v1974, %v1975
    %v1977 = vrot.slane %v1976, 2
    %v1978 = vadd.f32 %v1976, %v1977
    %v1979 = vrot.slane %v1978, 1
    %v1980 = vadd.f32 %v1978, %v1979
    %v1981 = vsel %vm561, %v1961, 0.0
    %v1982 = vrot.slane %v1981, 4
    %v1983 = vadd.f32 %v1981, %v1982
    %v1984 = vrot.slane %v1983, 2
    %v1985 = vadd.f32 %v1983, %v1984
    %v1986 = vrot.slane %v1985, 1
    %v1987 = vadd.f32 %v1985, %v1986
    %v1988 = vsel %vm561, %v1962, 0.0
    %v1989 = vrot.slane %v1988, 4
    %v1990 = vadd.f32 %v1988, %v1989
    %v1991 = vrot.slane %v1990, 2
    %v1992 = vadd.f32 %v1990, %v1991
    %v1993 = vrot.slane %v1992, 1
    %v1994 = vadd.f32 %v1992, %v1993
    %v1995 = vsel %vm561, %v1963, 0.0
    %v1996 = vrot.slane %v1995, 4
    %v1997 = vadd.f32 %v1995, %v1996
    %v1998 = vrot.slane %v1997, 2
    %v1999 = vadd.f32 %v1997, %v1998
    %v2000 = vrot.slane %v1999, 1
    %v2001 = vadd.f32 %v1999, %v2000
    %v2002 = vsel %vm561, %v1964, 0.0
    %v2003 = vrot.slane %v2002, 4
    %v2004 = vadd.f32 %v2002, %v2003
    %v2005 = vrot.slane %v2004, 2
    %v2006 = vadd.f32 %v2004, %v2005
    %v2007 = vrot.slane %v2006, 1
    %v2008 = vadd.f32 %v2006, %v2007
    %v2009 = vsel %vm561, %v1965, 0.0
    %v2010 = vrot.slane %v2009, 4
    %v2011 = vadd.f32 %v2009, %v2010
    %v2012 = vrot.slane %v2011, 2
    %v2013 = vadd.f32 %v2011, %v2012
    %v2014 = vrot.slane %v2013, 1
    %v2015 = vadd.f32 %v2013, %v2014
    %v2016 = vsel %vm561, %v1966, 0.0
    %v2017 = vrot.slane %v2016, 4
    %v2018 = vadd.f32 %v2016, %v2017
    %v2019 = vrot.slane %v2018, 2
    %v2020 = vadd.f32 %v2018, %v2019
    %v2021 = vrot.slane %v2020, 1
    %v2022 = vadd.f32 %v2020, %v2021
    %v2023 = vsub.f32 %v1973, 1.0
    %v2024 = vsub.f32 %v1980, 1.0
    %v2025 = vsub.f32 %v1987, 1.0
    %v2026 = vsub.f32 %v1994, 1.0
    %v2027 = vsub.f32 %v2001, 1.0
    %v2028 = vsub.f32 %v2008, 1.0
    %v2029 = vsub.f32 %v2015, 1.0
    %v2030 = vsub.f32 %v2022, 1.0
    %v2031 = vmax.f32 %v2023, 0.0
    %v2032 = vmax.f32 %v2024, 0.0
    %v2033 = vmax.f32 %v2025, 0.0
    %v2034 = vmax.f32 %v2026, 0.0
    %v2035 = vmax.f32 %v2027, 0.0
    %v2036 = vmax.f32 %v2028, 0.0
    %v2037 = vmax.f32 %v2029, 0.0
    %v2038 = vmax.f32 %v2030, 0.0
    %v2039 = vmul.f32 %v1479, %v2031
    %v2040 = vmul.f32 %v1479, %v2032
    %v2041 = vmul.f32 %v1479, %v2033
    %v2042 = vmul.f32 %v1479, %v2034
    %v2043 = vmul.f32 %v1479, %v2035
    %v2044 = vmul.f32 %v1479, %v2036
    %v2045 = vmul.f32 %v1479, %v2037
    %v2046 = vmul.f32 %v1479, %v2038
    %v2047 = vadd.f32 %v1488, %v2039
    %v2048 = vadd.f32 %v1489, %v2040
    %v2049 = vadd.f32 %v1490, %v2041
    %v2050 = vadd.f32 %v1491, %v2042
    %v2051 = vadd.f32 %v1492, %v2043
    %v2052 = vadd.f32 %v1493, %v2044
    %v2053 = vadd.f32 %v1494, %v2045
    %v2054 = vadd.f32 %v1495, %v2046
    %v2055 = vmul.f32 %v2023, %v927
    %v2056 = vmul.f32 %v2024, %v927
    %v2057 = vmul.f32 %v2025, %v927
    %v2058 = vmul.f32 %v2026, %v927
    %v2059 = vmul.f32 %v2027, %v927
    %v2060 = vmul.f32 %v2028, %v927
    %v2061 = vmul.f32 %v2029, %v927
    %v2062 = vmul.f32 %v2030, %v927
    %v2063 = vxor.u32 %v2055, 2147483648
    %v2064 = vxor.u32 %v2056, 2147483648
    %v2065 = vxor.u32 %v2057, 2147483648
    %v2066 = vxor.u32 %v2058, 2147483648
    %v2067 = vxor.u32 %v2059, 2147483648
    %v2068 = vxor.u32 %v2060, 2147483648
    %v2069 = vxor.u32 %v2061, 2147483648
    %v2070 = vxor.u32 %v2062, 2147483648
    %v2071 = vmul.f32 %v2063, 1.442695
    %v2072 = vpow.pop %v2071
    %v2073 = vmul.f32 %v2064, 1.442695
    %v2074 = vpow.pop %v2073
    %v2075 = vmul.f32 %v2065, 1.442695
    %v2076 = vpow.pop %v2075
    %v2077 = vmul.f32 %v2066, 1.442695
    %v2078 = vpow.pop %v2077
    %v2079 = vmul.f32 %v2067, 1.442695
    %v2080 = vpow.pop %v2079
    %v2081 = vmul.f32 %v2068, 1.442695
    %v2082 = vpow.pop %v2081
    %v2083 = vmul.f32 %v2069, 1.442695
    %v2084 = vpow.pop %v2083
    %v2085 = vmul.f32 %v2070, 1.442695
    %v2086 = vpow.pop %v2085
    %v2087 = vadd.f32 %v2072, 1.0
    %v2088 = vadd.f32 %v2074, 1.0
    %v2089 = vadd.f32 %v2076, 1.0
    %v2090 = vadd.f32 %v2078, 1.0
    %v2091 = vadd.f32 %v2080, 1.0
    %v2092 = vadd.f32 %v2082, 1.0
    %v2093 = vadd.f32 %v2084, 1.0
    %v2094 = vadd.f32 %v2086, 1.0
    %v2095 = vrcp.pop %v2087
    %v2096 = vmul.f32 1.0, %v2095
    %v2097 = vrcp.pop %v2088
    %v2098 = vmul.f32 1.0, %v2097
    %v2099 = vrcp.pop %v2089
    %v2100 = vmul.f32 1.0, %v2099
    %v2101 = vrcp.pop %v2090
    %v2102 = vmul.f32 1.0, %v2101
    %v2103 = vrcp.pop %v2091
    %v2104 = vmul.f32 1.0, %v2103
    %v2105 = vrcp.pop %v2092
    %v2106 = vmul.f32 1.0, %v2105
    %v2107 = vrcp.pop %v2093
    %v2108 = vmul.f32 1.0, %v2107
    %v2109 = vrcp.pop %v2094
    %v2110 = vmul.f32 1.0, %v2109
    %v2111 = vmul.f32 %v2047, %v2096
    %v2112 = vmul.f32 %v2048, %v2098
    %v2113 = vmul.f32 %v2049, %v2100
    %v2114 = vmul.f32 %v2050, %v2102
    %v2115 = vmul.f32 %v2051, %v2104
    %v2116 = vmul.f32 %v2052, %v2106
    %v2117 = vmul.f32 %v2053, %v2108
    %v2118 = vmul.f32 %v2054, %v2110
    %v2127 = vsel %vm1000, %v2112, %v2111
    %v2128 = vsel %vm1002, %v2113, %v2127
    %v2129 = vsel %vm1004, %v2114, %v2128
    %v2130 = vsel %vm1006, %v2115, %v2129
    %v2131 = vsel %vm1008, %v2116, %v2130
    %v2132 = vsel %vm1010, %v2117, %v2131
    %v2133 = vsel %vm1012, %v2118, %v2132
    %v2135 = vsel %vm561, %v2133, 0.0
    %2136 = vadd.xlane.f32.xlu0 %v2135
    %v2137 = vpop.xlane.xlu0 %2136
    %2138 = vxpose.xlu0.b32.start [1/16] %v2137, 128
    %2139 = vxpose.xlu0.b32.cont [2/16] 0.0, 128
    %2140 = vxpose.xlu0.b32.cont [3/16] 0.0, 128
    %2141 = vxpose.xlu0.b32.cont [4/16] 0.0, 128
    %2142 = vxpose.xlu0.b32.cont [5/16] 0.0, 128
    %2143 = vxpose.xlu0.b32.cont [6/16] 0.0, 128
    %2144 = vxpose.xlu0.b32.cont [7/16] 0.0, 128
    %2145 = vxpose.xlu0.b32.cont [8/16] 0.0, 128
    %2146 = vxpose.xlu0.b32.cont [9/16] 0.0, 128
    %2147 = vxpose.xlu0.b32.cont [10/16] 0.0, 128
    %2148 = vxpose.xlu0.b32.cont [11/16] 0.0, 128
    %2149 = vxpose.xlu0.b32.cont [12/16] 0.0, 128
    %2150 = vxpose.xlu0.b32.cont [13/16] 0.0, 128
    %2151 = vxpose.xlu0.b32.cont [14/16] 0.0, 128
    %2152 = vxpose.xlu0.b32.cont [15/16] 0.0, 128
    %2153 = vxpose.xlu0.b32.end [16/16] 0.0, 128
    %v2154 = vpop.trf.xlu0
    %v2155 = vpop.trf.xlu0
    %v2156 = vpop.trf.xlu0
    %v2157 = vpop.trf.xlu0
    %v2158 = vpop.trf.xlu0
    %v2159 = vpop.trf.xlu0
    %v2160 = vpop.trf.xlu0
    %v2161 = vpop.trf.xlu0
    %v2162 = vpop.trf.xlu0
    %v2163 = vpop.trf.xlu0
    %v2164 = vpop.trf.xlu0
    %v2165 = vpop.trf.xlu0
    %v2166 = vpop.trf.xlu0
    %v2167 = vpop.trf.xlu0
    %v2168 = vpop.trf.xlu0
    %v2169 = vpop.trf.xlu0
    %v2170 = vsub.f32 %v907, %v2137
    %v2171 = vsub.f32 %v908, %v2137
    %v2172 = vsub.f32 %v909, %v2137
    %v2173 = vsub.f32 %v910, %v2137
    %v2174 = vsub.f32 %v911, %v2137
    %v2175 = vsub.f32 %v912, %v2137
    %v2176 = vsub.f32 %v913, %v2137
    %v2177 = vsub.f32 %v914, %v2137
    %v2178 = vlaneseq
    %v2179 = vshrl.u32 %v2178, 7
    %v2180 = vsub.s32 0, %v2179
    %v2181 = vrot.slane %v2154, %v2180
    %v2182 = vsub.f32 %v2170, %v2181
    %v2183 = vsub.f32 %v2171, %v2181
    %v2184 = vsub.f32 %v2172, %v2181
    %v2185 = vsub.f32 %v2173, %v2181
    %v2186 = vsub.f32 %v2174, %v2181
    %v2187 = vsub.f32 %v2175, %v2181
    %v2188 = vsub.f32 %v2176, %v2181
    %v2189 = vsub.f32 %v2177, %v2181
    %v2190 = vmul.f32 %v1679, %v919
    %v2191 = vmul.f32 %v1680, %v920
    %v2192 = vmul.f32 %v1681, %v921
    %v2193 = vmul.f32 %v1682, %v922
    %v2194 = vmul.f32 %v1683, %v923
    %v2195 = vmul.f32 %v1684, %v924
    %v2196 = vmul.f32 %v1685, %v925
    %v2197 = vmul.f32 %v1686, %v926
    %v2198 = vmul.f32 %v2190, %v2182
    %v2199 = vmul.f32 %v2191, %v2183
    %v2200 = vmul.f32 %v2192, %v2184
    %v2201 = vmul.f32 %v2193, %v2185
    %v2202 = vmul.f32 %v2194, %v2186
    %v2203 = vmul.f32 %v2195, %v2187
    %v2204 = vmul.f32 %v2196, %v2188
    %v2205 = vmul.f32 %v2197, %v2189
    %v2206 = vadd.f32 %v1679, %v2198
    %v2207 = vadd.f32 %v1680, %v2199
    %v2208 = vadd.f32 %v1681, %v2200
    %v2209 = vadd.f32 %v1682, %v2201
    %v2210 = vadd.f32 %v1683, %v2202
    %v2211 = vadd.f32 %v1684, %v2203
    %v2212 = vadd.f32 %v1685, %v2204
    %v2213 = vadd.f32 %v1686, %v2205
    %v2214 = vand.u32 2147483647, %v2206
    %v2215 = vand.u32 2147483647, %v2207
    %v2216 = vand.u32 2147483647, %v2208
    %v2217 = vand.u32 2147483647, %v2209
    %v2218 = vand.u32 2147483647, %v2210
    %v2219 = vand.u32 2147483647, %v2211
    %v2220 = vand.u32 2147483647, %v2212
    %v2221 = vand.u32 2147483647, %v2213
    %v2222 = vsub.f32 %v2214, %v1102
    %v2223 = vsub.f32 %v2215, %v1102
    %v2224 = vsub.f32 %v2216, %v1102
    %v2225 = vsub.f32 %v2217, %v1102
    %v2226 = vsub.f32 %v2218, %v1102
    %v2227 = vsub.f32 %v2219, %v1102
    %v2228 = vsub.f32 %v2220, %v1102
    %v2229 = vsub.f32 %v2221, %v1102
    %v2230 = vmax.f32 %v2222, 0.0
    %v2231 = vmax.f32 %v2223, 0.0
    %v2232 = vmax.f32 %v2224, 0.0
    %v2233 = vmax.f32 %v2225, 0.0
    %v2234 = vmax.f32 %v2226, 0.0
    %v2235 = vmax.f32 %v2227, 0.0
    %v2236 = vmax.f32 %v2228, 0.0
    %v2237 = vmax.f32 %v2229, 0.0
    %v2238 = vmin.f32 %v2230, 1.0
    %v2239 = vmin.f32 %v2231, 1.0
    %v2240 = vmin.f32 %v2232, 1.0
    %v2241 = vmin.f32 %v2233, 1.0
    %v2242 = vmin.f32 %v2234, 1.0
    %v2243 = vmin.f32 %v2235, 1.0
    %v2244 = vmin.f32 %v2236, 1.0
    %v2245 = vmin.f32 %v2237, 1.0
    %v2246 = vmul.f32 %v2238, %v2238
    %v2247 = vmul.f32 %v2239, %v2239
    %v2248 = vmul.f32 %v2240, %v2240
    %v2249 = vmul.f32 %v2241, %v2241
    %v2250 = vmul.f32 %v2242, %v2242
    %v2251 = vmul.f32 %v2243, %v2243
    %v2252 = vmul.f32 %v2244, %v2244
    %v2253 = vmul.f32 %v2245, %v2245
    %2254 = vxpose.xlu0.b32.start [1/16] %v2246, 128
    %2255 = vxpose.xlu0.b32.cont [2/16] 0.0, 128
    %2256 = vxpose.xlu0.b32.cont [3/16] 0.0, 128
    %2257 = vxpose.xlu0.b32.cont [4/16] 0.0, 128
    %2258 = vxpose.xlu0.b32.cont [5/16] 0.0, 128
    %2259 = vxpose.xlu0.b32.cont [6/16] 0.0, 128
    %2260 = vxpose.xlu0.b32.cont [7/16] 0.0, 128
    %2261 = vxpose.xlu0.b32.cont [8/16] 0.0, 128
    %2262 = vxpose.xlu0.b32.cont [9/16] 0.0, 128
    %2263 = vxpose.xlu0.b32.cont [10/16] 0.0, 128
    %2264 = vxpose.xlu0.b32.cont [11/16] 0.0, 128
    %2265 = vxpose.xlu0.b32.cont [12/16] 0.0, 128
    %2266 = vxpose.xlu0.b32.cont [13/16] 0.0, 128
    %2267 = vxpose.xlu0.b32.cont [14/16] 0.0, 128
    %2268 = vxpose.xlu0.b32.cont [15/16] 0.0, 128
    %2269 = vxpose.xlu0.b32.end [16/16] 0.0, 128
    %v2270 = vpop.trf.xlu0
    %v2271 = vpop.trf.xlu0
    %v2272 = vpop.trf.xlu0
    %v2273 = vpop.trf.xlu0
    %v2274 = vpop.trf.xlu0
    %v2275 = vpop.trf.xlu0
    %v2276 = vpop.trf.xlu0
    %v2277 = vpop.trf.xlu0
    %v2278 = vpop.trf.xlu0
    %v2279 = vpop.trf.xlu0
    %v2280 = vpop.trf.xlu0
    %v2281 = vpop.trf.xlu0
    %v2282 = vpop.trf.xlu0
    %v2283 = vpop.trf.xlu0
    %v2284 = vpop.trf.xlu0
    %v2285 = vpop.trf.xlu0
    %2286 = vxpose.xlu0.b32.start [1/16] %v2247, 128
    %2287 = vxpose.xlu0.b32.cont [2/16] 0.0, 128
    %2288 = vxpose.xlu0.b32.cont [3/16] 0.0, 128
    %2289 = vxpose.xlu0.b32.cont [4/16] 0.0, 128
    %2290 = vxpose.xlu0.b32.cont [5/16] 0.0, 128
    %2291 = vxpose.xlu0.b32.cont [6/16] 0.0, 128
    %2292 = vxpose.xlu0.b32.cont [7/16] 0.0, 128
    %2293 = vxpose.xlu0.b32.cont [8/16] 0.0, 128
    %2294 = vxpose.xlu0.b32.cont [9/16] 0.0, 128
    %2295 = vxpose.xlu0.b32.cont [10/16] 0.0, 128
    %2296 = vxpose.xlu0.b32.cont [11/16] 0.0, 128
    %2297 = vxpose.xlu0.b32.cont [12/16] 0.0, 128
    %2298 = vxpose.xlu0.b32.cont [13/16] 0.0, 128
    %2299 = vxpose.xlu0.b32.cont [14/16] 0.0, 128
    %2300 = vxpose.xlu0.b32.cont [15/16] 0.0, 128
    %2301 = vxpose.xlu0.b32.end [16/16] 0.0, 128
    %v2302 = vpop.trf.xlu0
    %v2303 = vpop.trf.xlu0
    %v2304 = vpop.trf.xlu0
    %v2305 = vpop.trf.xlu0
    %v2306 = vpop.trf.xlu0
    %v2307 = vpop.trf.xlu0
    %v2308 = vpop.trf.xlu0
    %v2309 = vpop.trf.xlu0
    %v2310 = vpop.trf.xlu0
    %v2311 = vpop.trf.xlu0
    %v2312 = vpop.trf.xlu0
    %v2313 = vpop.trf.xlu0
    %v2314 = vpop.trf.xlu0
    %v2315 = vpop.trf.xlu0
    %v2316 = vpop.trf.xlu0
    %v2317 = vpop.trf.xlu0
    %2318 = vxpose.xlu0.b32.start [1/16] %v2248, 128
    %2319 = vxpose.xlu0.b32.cont [2/16] 0.0, 128
    %2320 = vxpose.xlu0.b32.cont [3/16] 0.0, 128
    %2321 = vxpose.xlu0.b32.cont [4/16] 0.0, 128
    %2322 = vxpose.xlu0.b32.cont [5/16] 0.0, 128
    %2323 = vxpose.xlu0.b32.cont [6/16] 0.0, 128
    %2324 = vxpose.xlu0.b32.cont [7/16] 0.0, 128
    %2325 = vxpose.xlu0.b32.cont [8/16] 0.0, 128
    %2326 = vxpose.xlu0.b32.cont [9/16] 0.0, 128
    %2327 = vxpose.xlu0.b32.cont [10/16] 0.0, 128
    %2328 = vxpose.xlu0.b32.cont [11/16] 0.0, 128
    %2329 = vxpose.xlu0.b32.cont [12/16] 0.0, 128
    %2330 = vxpose.xlu0.b32.cont [13/16] 0.0, 128
    %2331 = vxpose.xlu0.b32.cont [14/16] 0.0, 128
    %2332 = vxpose.xlu0.b32.cont [15/16] 0.0, 128
    %2333 = vxpose.xlu0.b32.end [16/16] 0.0, 128
    %v2334 = vpop.trf.xlu0
    %v2335 = vpop.trf.xlu0
    %v2336 = vpop.trf.xlu0
    %v2337 = vpop.trf.xlu0
    %v2338 = vpop.trf.xlu0
    %v2339 = vpop.trf.xlu0
    %v2340 = vpop.trf.xlu0
    %v2341 = vpop.trf.xlu0
    %v2342 = vpop.trf.xlu0
    %v2343 = vpop.trf.xlu0
    %v2344 = vpop.trf.xlu0
    %v2345 = vpop.trf.xlu0
    %v2346 = vpop.trf.xlu0
    %v2347 = vpop.trf.xlu0
    %v2348 = vpop.trf.xlu0
    %v2349 = vpop.trf.xlu0
    %2350 = vxpose.xlu0.b32.start [1/16] %v2249, 128
    %2351 = vxpose.xlu0.b32.cont [2/16] 0.0, 128
    %2352 = vxpose.xlu0.b32.cont [3/16] 0.0, 128
    %2353 = vxpose.xlu0.b32.cont [4/16] 0.0, 128
    %2354 = vxpose.xlu0.b32.cont [5/16] 0.0, 128
    %2355 = vxpose.xlu0.b32.cont [6/16] 0.0, 128
    %2356 = vxpose.xlu0.b32.cont [7/16] 0.0, 128
    %2357 = vxpose.xlu0.b32.cont [8/16] 0.0, 128
    %2358 = vxpose.xlu0.b32.cont [9/16] 0.0, 128
    %2359 = vxpose.xlu0.b32.cont [10/16] 0.0, 128
    %2360 = vxpose.xlu0.b32.cont [11/16] 0.0, 128
    %2361 = vxpose.xlu0.b32.cont [12/16] 0.0, 128
    %2362 = vxpose.xlu0.b32.cont [13/16] 0.0, 128
    %2363 = vxpose.xlu0.b32.cont [14/16] 0.0, 128
    %2364 = vxpose.xlu0.b32.cont [15/16] 0.0, 128
    %2365 = vxpose.xlu0.b32.end [16/16] 0.0, 128
    %v2366 = vpop.trf.xlu0
    %v2367 = vpop.trf.xlu0
    %v2368 = vpop.trf.xlu0
    %v2369 = vpop.trf.xlu0
    %v2370 = vpop.trf.xlu0
    %v2371 = vpop.trf.xlu0
    %v2372 = vpop.trf.xlu0
    %v2373 = vpop.trf.xlu0
    %v2374 = vpop.trf.xlu0
    %v2375 = vpop.trf.xlu0
    %v2376 = vpop.trf.xlu0
    %v2377 = vpop.trf.xlu0
    %v2378 = vpop.trf.xlu0
    %v2379 = vpop.trf.xlu0
    %v2380 = vpop.trf.xlu0
    %v2381 = vpop.trf.xlu0
    %2382 = vxpose.xlu0.b32.start [1/16] %v2250, 128
    %2383 = vxpose.xlu0.b32.cont [2/16] 0.0, 128
    %2384 = vxpose.xlu0.b32.cont [3/16] 0.0, 128
    %2385 = vxpose.xlu0.b32.cont [4/16] 0.0, 128
    %2386 = vxpose.xlu0.b32.cont [5/16] 0.0, 128
    %2387 = vxpose.xlu0.b32.cont [6/16] 0.0, 128
    %2388 = vxpose.xlu0.b32.cont [7/16] 0.0, 128
    %2389 = vxpose.xlu0.b32.cont [8/16] 0.0, 128
    %2390 = vxpose.xlu0.b32.cont [9/16] 0.0, 128
    %2391 = vxpose.xlu0.b32.cont [10/16] 0.0, 128
    %2392 = vxpose.xlu0.b32.cont [11/16] 0.0, 128
    %2393 = vxpose.xlu0.b32.cont [12/16] 0.0, 128
    %2394 = vxpose.xlu0.b32.cont [13/16] 0.0, 128
    %2395 = vxpose.xlu0.b32.cont [14/16] 0.0, 128
    %2396 = vxpose.xlu0.b32.cont [15/16] 0.0, 128
    %2397 = vxpose.xlu0.b32.end [16/16] 0.0, 128
    %v2398 = vpop.trf.xlu0
    %v2399 = vpop.trf.xlu0
    %v2400 = vpop.trf.xlu0
    %v2401 = vpop.trf.xlu0
    %v2402 = vpop.trf.xlu0
    %v2403 = vpop.trf.xlu0
    %v2404 = vpop.trf.xlu0
    %v2405 = vpop.trf.xlu0
    %v2406 = vpop.trf.xlu0
    %v2407 = vpop.trf.xlu0
    %v2408 = vpop.trf.xlu0
    %v2409 = vpop.trf.xlu0
    %v2410 = vpop.trf.xlu0
    %v2411 = vpop.trf.xlu0
    %v2412 = vpop.trf.xlu0
    %v2413 = vpop.trf.xlu0
    %2414 = vxpose.xlu0.b32.start [1/16] %v2251, 128
    %2415 = vxpose.xlu0.b32.cont [2/16] 0.0, 128
    %2416 = vxpose.xlu0.b32.cont [3/16] 0.0, 128
    %2417 = vxpose.xlu0.b32.cont [4/16] 0.0, 128
    %2418 = vxpose.xlu0.b32.cont [5/16] 0.0, 128
    %2419 = vxpose.xlu0.b32.cont [6/16] 0.0, 128
    %2420 = vxpose.xlu0.b32.cont [7/16] 0.0, 128
    %2421 = vxpose.xlu0.b32.cont [8/16] 0.0, 128
    %2422 = vxpose.xlu0.b32.cont [9/16] 0.0, 128
    %2423 = vxpose.xlu0.b32.cont [10/16] 0.0, 128
    %2424 = vxpose.xlu0.b32.cont [11/16] 0.0, 128
    %2425 = vxpose.xlu0.b32.cont [12/16] 0.0, 128
    %2426 = vxpose.xlu0.b32.cont [13/16] 0.0, 128
    %2427 = vxpose.xlu0.b32.cont [14/16] 0.0, 128
    %2428 = vxpose.xlu0.b32.cont [15/16] 0.0, 128
    %2429 = vxpose.xlu0.b32.end [16/16] 0.0, 128
    %v2430 = vpop.trf.xlu0
    %v2431 = vpop.trf.xlu0
    %v2432 = vpop.trf.xlu0
    %v2433 = vpop.trf.xlu0
    %v2434 = vpop.trf.xlu0
    %v2435 = vpop.trf.xlu0
    %v2436 = vpop.trf.xlu0
    %v2437 = vpop.trf.xlu0
    %v2438 = vpop.trf.xlu0
    %v2439 = vpop.trf.xlu0
    %v2440 = vpop.trf.xlu0
    %v2441 = vpop.trf.xlu0
    %v2442 = vpop.trf.xlu0
    %v2443 = vpop.trf.xlu0
    %v2444 = vpop.trf.xlu0
    %v2445 = vpop.trf.xlu0
    %2446 = vxpose.xlu0.b32.start [1/16] %v2252, 128
    %2447 = vxpose.xlu0.b32.cont [2/16] 0.0, 128
    %2448 = vxpose.xlu0.b32.cont [3/16] 0.0, 128
    %2449 = vxpose.xlu0.b32.cont [4/16] 0.0, 128
    %2450 = vxpose.xlu0.b32.cont [5/16] 0.0, 128
    %2451 = vxpose.xlu0.b32.cont [6/16] 0.0, 128
    %2452 = vxpose.xlu0.b32.cont [7/16] 0.0, 128
    %2453 = vxpose.xlu0.b32.cont [8/16] 0.0, 128
    %2454 = vxpose.xlu0.b32.cont [9/16] 0.0, 128
    %2455 = vxpose.xlu0.b32.cont [10/16] 0.0, 128
    %2456 = vxpose.xlu0.b32.cont [11/16] 0.0, 128
    %2457 = vxpose.xlu0.b32.cont [12/16] 0.0, 128
    %2458 = vxpose.xlu0.b32.cont [13/16] 0.0, 128
    %2459 = vxpose.xlu0.b32.cont [14/16] 0.0, 128
    %2460 = vxpose.xlu0.b32.cont [15/16] 0.0, 128
    %2461 = vxpose.xlu0.b32.end [16/16] 0.0, 128
    %v2462 = vpop.trf.xlu0
    %v2463 = vpop.trf.xlu0
    %v2464 = vpop.trf.xlu0
    %v2465 = vpop.trf.xlu0
    %v2466 = vpop.trf.xlu0
    %v2467 = vpop.trf.xlu0
    %v2468 = vpop.trf.xlu0
    %v2469 = vpop.trf.xlu0
    %v2470 = vpop.trf.xlu0
    %v2471 = vpop.trf.xlu0
    %v2472 = vpop.trf.xlu0
    %v2473 = vpop.trf.xlu0
    %v2474 = vpop.trf.xlu0
    %v2475 = vpop.trf.xlu0
    %v2476 = vpop.trf.xlu0
    %v2477 = vpop.trf.xlu0
    %2478 = vxpose.xlu0.b32.start [1/16] %v2253, 128
    %2479 = vxpose.xlu0.b32.cont [2/16] 0.0, 128
    %2480 = vxpose.xlu0.b32.cont [3/16] 0.0, 128
    %2481 = vxpose.xlu0.b32.cont [4/16] 0.0, 128
    %2482 = vxpose.xlu0.b32.cont [5/16] 0.0, 128
    %2483 = vxpose.xlu0.b32.cont [6/16] 0.0, 128
    %2484 = vxpose.xlu0.b32.cont [7/16] 0.0, 128
    %2485 = vxpose.xlu0.b32.cont [8/16] 0.0, 128
    %2486 = vxpose.xlu0.b32.cont [9/16] 0.0, 128
    %2487 = vxpose.xlu0.b32.cont [10/16] 0.0, 128
    %2488 = vxpose.xlu0.b32.cont [11/16] 0.0, 128
    %2489 = vxpose.xlu0.b32.cont [12/16] 0.0, 128
    %2490 = vxpose.xlu0.b32.cont [13/16] 0.0, 128
    %2491 = vxpose.xlu0.b32.cont [14/16] 0.0, 128
    %2492 = vxpose.xlu0.b32.cont [15/16] 0.0, 128
    %2493 = vxpose.xlu0.b32.end [16/16] 0.0, 128
    %v2494 = vpop.trf.xlu0
    %v2495 = vpop.trf.xlu0
    %v2496 = vpop.trf.xlu0
    %v2497 = vpop.trf.xlu0
    %v2498 = vpop.trf.xlu0
    %v2499 = vpop.trf.xlu0
    %v2500 = vpop.trf.xlu0
    %v2501 = vpop.trf.xlu0
    %v2502 = vpop.trf.xlu0
    %v2503 = vpop.trf.xlu0
    %v2504 = vpop.trf.xlu0
    %v2505 = vpop.trf.xlu0
    %v2506 = vpop.trf.xlu0
    %v2507 = vpop.trf.xlu0
    %v2508 = vpop.trf.xlu0
    %v2509 = vpop.trf.xlu0
    %v2510 = vadd.f32 %v2246, %v2270
    %v2511 = vadd.f32 %v2247, %v2302
    %v2512 = vadd.f32 %v2248, %v2334
    %v2513 = vadd.f32 %v2249, %v2366
    %v2514 = vadd.f32 %v2250, %v2398
    %v2515 = vadd.f32 %v2251, %v2430
    %v2516 = vadd.f32 %v2252, %v2462
    %v2517 = vadd.f32 %v2253, %v2494
    %v2518 = vmul.f32 %v2510, %v79
    %v2519 = vmul.f32 %v2511, %v80
    %v2520 = vmul.f32 %v2512, %v81
    %v2521 = vmul.f32 %v2513, %v82
    %v2522 = vmul.f32 %v2514, %v83
    %v2523 = vmul.f32 %v2515, %v84
    %v2524 = vmul.f32 %v2516, %v85
    %v2525 = vmul.f32 %v2517, %v86
    %2526 = vst.msk [vmem:[#allocation9] sm:$0xff] %vm561, %v2518
    %2527 = vst.msk [vmem:[#allocation9 + $0x8] sm:$0xff] %vm561, %v2519
    %2528 = vst.msk [vmem:[#allocation9 + $0x10] sm:$0xff] %vm561, %v2520
    %2529 = vst.msk [vmem:[#allocation9 + $0x18] sm:$0xff] %vm561, %v2521
    %2530 = vst.msk [vmem:[#allocation9 + $0x20] sm:$0xff] %vm561, %v2522
    %2531 = vst.msk [vmem:[#allocation9 + $0x28] sm:$0xff] %vm561, %v2523
    %2532 = vst.msk [vmem:[#allocation9 + $0x30] sm:$0xff] %vm561, %v2524
    %2533 = vst.msk [vmem:[#allocation9 + $0x38] sm:$0xff] %vm561, %v2525
    // Predicated region
    $region26: #{tpu_custom_call.1} parent=1 // pred_check
      _
    $region27: #{tpu_custom_call.1} parent=1 // pred_check_branch
      %2535 = sbr.rel (0) target = $region29
    $region28: #{tpu_custom_call.1} parent=1 // pred_region
      %s2537 = ssub.s32 1024, 1024
      %2538 = vsyncadd [#allocation4], %s2537
      %s2539 = sshll.u32 [#allocation9], 4
      %s2540 = int_to_ptr.vmem [resolvable:$true] %s2539
      %2545 = dma.vmem_to_hbm [thread:$0]  %s2540, 1024, %s3, [#allocation4], 128, 128, 8
    $region29: #{tpu_custom_call.1} parent=1 // pred_fallthru
      _
    // Predicated region
    $region30: #{tpu_custom_call.1} parent=1 // pred_check
      _
    $region31: #{tpu_custom_call.1} parent=1 // pred_check_branch
      %2547 = sbr.rel (0) target = $region33
    $region32: #{tpu_custom_call.1} parent=1 // pred_region
      %2548 = dma.done [#allocation4], 1024
    $region33: #{tpu_custom_call.1} parent=1 // pred_fallthru
      _
    %2549 = vsyncpa [#allocation3], 1
    %2550 = vsyncpa [#allocation8], 1
    %2551 = vsyncpa [#allocation4], 1
    %2552 = vsyncpa [#allocation5], 1

</llo_original>
